<compile_context>
chip_gen: v7x
topology: tpu7x:2x2x1
jax: 0.10.0
libtpu: 0.0.40
codegen_flags: <defaults>
</compile_context>

<pallas_src>
import jax
import jax.numpy as jnp
from jax import lax
from jax.experimental import pallas as pl
from jax.experimental.pallas import tpu as pltpu

# CFG constants (CFG is undefined in the reference source; fixed deterministically)
SIGMA = 10.0         # CFG.sigma
TEMPERATURE = 1.0    # CFG.temperature
BETA = 0.1           # CFG.Beta
LN_EPS = 1e-5        # nn.LayerNorm default eps


# ----------------------- in-kernel projection head -----------------------

def _projection(x, w1, b1, w2, b2, gamma, beta):
    """ProjectionHead: Linear -> GELU -> Linear -> (+residual) -> LayerNorm."""
    projected = jnp.dot(x, w1, preferred_element_type=jnp.float32) + b1
    # TODO(synk): PyTorch nn.GELU default is exact erf GELU; tanh approximation used here.
    c = 0.7978845608028654  # sqrt(2/pi)
    h = 0.5 * projected * (1.0 + jnp.tanh(
        c * (projected + 0.044715 * projected * projected * projected)))
    h = jnp.dot(h, w2, preferred_element_type=jnp.float32) + b2
    h = h + projected                        # dropout is identity (eval mode)
    mu = jnp.mean(h, axis=-1, keepdims=True)
    var = jnp.mean((h - mu) * (h - mu), axis=-1, keepdims=True)
    y = (h - mu) * lax.rsqrt(var + LN_EPS)
    return y * gamma + beta


# --------------------------- fused forward kernel ---------------------------

def _st_gchb_kernel(si_ref, sf_ref, gi_ref, gf_ref,
                    sw1_ref, sb1_ref, sw2_ref, sb2_ref, sg_ref, sbt_ref,
                    iw1_ref, ib1_ref, iw2_ref, ib2_ref, ig_ref, ibt_ref,
                    o_ref):
    n = si_ref.shape[0]
    inv_s2 = 1.0 / (SIGMA * SIGMA)
    scale = 1.0 / float((n - 1) ** 2)

    def mm_nt(a, b):
        # a @ b.T without materializing any transpose (MXU consumes operands directly).
        return lax.dot_general(a, b, (((1,), (1,)), ((), ())),
                               preferred_element_type=jnp.float32)

    def sum_all(x):  # (M, K) -> (1, 1)
        return jnp.sum(jnp.sum(x, axis=1, keepdims=True), axis=0, keepdims=True)

    def gram(z):
        """RBF Gram matrix exp(-clamp(||zi||^2 + ||zj||^2 - 2 zi.zj, 0) / sigma^2)."""
        zz = z * z
        sq_col = jnp.sum(zz, axis=1, keepdims=True)             # (N, 1)
        sq_row = jnp.sum(zz, axis=1).reshape(1, n)               # (1, N)
        d = jnp.maximum(sq_col + sq_row - 2.0 * mm_nt(z, z), 0.0)
        return jnp.exp(-d * inv_s2)

    def dcenter(k):
        """Analytic double-centering: H @ K @ H == K - rowmean - colmean + grandmean."""
        rm = jnp.mean(k, axis=1, keepdims=True)                  # (N, 1)
        cm = jnp.mean(k, axis=0, keepdims=True)                  # (1, N)
        gm = jnp.mean(cm, axis=1, keepdims=True)                 # (1, 1)
        return k - rm - cm + gm

    def hsic(dc_kx, ky):
        # trace(KX H KY H) / (N-1)^2 == sum(dcenter(KX) * KY) / (N-1)^2  (KY symmetric)
        return sum_all(dc_kx * ky) * scale                       # (1, 1)

    spot_features = sf_ref[...]                                   # (N, E)
    graph_features = gf_ref[...]                                  # (N, E)

    # Both projection heads computed in-kernel (embeddings never hit HBM).
    s_emb = _projection(spot_features, sw1_ref[...], sb1_ref[...], sw2_ref[...],
                        sb2_ref[...], sg_ref[...], sbt_ref[...])  # (N, P)
    g_emb = _projection(graph_features, iw1_ref[...], ib1_ref[...], iw2_ref[...],
                        ib2_ref[...], ig_ref[...], ibt_ref[...])  # (N, P)

    # 6 distinct Gram matrices, each built exactly once.
    k_si = gram(si_ref[...])
    k_sf = gram(spot_features)
    k_se = gram(s_emb)
    k_gi = gram(gi_ref[...])
    k_gf = gram(graph_features)
    k_ge = gram(g_emb)

    dc_si = dcenter(k_si)
    dc_sf = dcenter(k_sf)
    dc_se = dcenter(k_se)
    dc_gi = dcenter(k_gi)
    dc_gf = dcenter(k_gf)

    h_si_sf = hsic(dc_si, k_sf)
    h_si_si = hsic(dc_si, k_si)
    h_sf_sf = hsic(dc_sf, k_sf)
    h_se_sf = hsic(dc_se, k_sf)
    h_se_se = hsic(dc_se, k_se)
    h_gi_gf = hsic(dc_gi, k_gf)
    h_gi_gi = hsic(dc_gi, k_gi)
    h_gf_gf = hsic(dc_gf, k_gf)
    h_gf_ge = hsic(dc_gf, k_ge)

    # nHSIC(X, Y) = HSIC(X,Y) / (sqrt(1+HSIC(X,X)) * sqrt(1+HSIC(Y,Y)))
    n_si_sf = h_si_sf * lax.rsqrt((1.0 + h_si_si) * (1.0 + h_sf_sf))
    n_se_sf = h_se_sf * lax.rsqrt((1.0 + h_se_se) * (1.0 + h_sf_sf))
    n_gi_gf = h_gi_gf * lax.rsqrt((1.0 + h_gi_gi) * (1.0 + h_gf_gf))

    hsic_spot = n_si_sf - BETA * n_se_sf
    hsic_img = n_gi_gf - BETA * h_gf_ge     # raw HSIC term, as in the reference code

    # Alignment loss (image_embeddings := graph embeddings, spot_embeddings := spot).
    logits = mm_nt(s_emb, g_emb) * (1.0 / TEMPERATURE)            # S @ I.T
    sim_i = mm_nt(g_emb, g_emb)                                   # I @ I.T
    sim_s = mm_nt(s_emb, s_emb)                                   # S @ S.T

    t = (sim_i + sim_s) * (0.5 * TEMPERATURE)
    t = t - jnp.max(t, axis=-1, keepdims=True)
    te = jnp.exp(t)
    targets = te / jnp.sum(te, axis=-1, keepdims=True)            # softmax(dim=-1)

    # row-wise log-softmax (spots_loss) and column-wise log-softmax (images_loss,
    # equivalent to log_softmax(logits.T, dim=-1) without any transpose).
    lr = logits - jnp.max(logits, axis=-1, keepdims=True)
    logsm_r = lr - jnp.log(jnp.sum(jnp.exp(lr), axis=-1, keepdims=True))
    lc = logits - jnp.max(logits, axis=0, keepdims=True)
    logsm_c = lc - jnp.log(jnp.sum(jnp.exp(lc), axis=0, keepdims=True))

    spots_sum = sum_all(-targets * logsm_r)     # sum_i spots_loss[i]
    images_sum = sum_all(-targets * logsm_c)    # sum_i images_loss[i]
    align = (spots_sum + images_sum) * (0.5 / n)

    loss = align + hsic_spot + hsic_img

    o_ref[0] = loss[0, 0]
    o_ref[1] = align[0, 0]
    o_ref[2] = hsic_spot[0, 0]
    o_ref[3] = hsic_img[0, 0]


# ----------------------------- forward wrapper -----------------------------

def st_gchb_core_forward(spot_Input, spot_features, graph_Input, graph_features,
                         spot_proj_params, image_proj_params):
    """Per-mini-batch loss core of ST_GCHB.forward (no optimizer/backward)."""
    vmem = pl.BlockSpec(memory_space=pltpu.MemorySpace.VMEM)
    args = (spot_Input, spot_features, graph_Input, graph_features,
            *spot_proj_params, *image_proj_params)
    out = pl.pallas_call(
        _st_gchb_kernel,
        out_shape=jax.ShapeDtypeStruct((4,), jnp.float32),
        in_specs=[vmem] * len(args),
        out_specs=pl.BlockSpec(memory_space=pltpu.MemorySpace.SMEM),
    )(*args)
    return out[0], out[1], out[2], out[3]


# ----------------------------- parameter init -----------------------------

def init_projection_params(key, embedding_dim, projection_dim):
    k1, k2 = jax.random.split(key)
    w1 = 0.02 * jax.random.normal(k1, (embedding_dim, projection_dim), jnp.float32)
    b1 = jnp.zeros((1, projection_dim), jnp.float32)
    w2 = 0.02 * jax.random.normal(k2, (projection_dim, projection_dim), jnp.float32)
    b2 = jnp.zeros((1, projection_dim), jnp.float32)
    gamma = jnp.ones((1, projection_dim), jnp.float32)
    beta = jnp.zeros((1, projection_dim), jnp.float32)
    return (w1, b1, w2, b2, gamma, beta)


# ----------------------------- main -----------------------------

if __name__ == "__main__":
    # batch_size = 16 (inner mini-batch of ST_GCHB.forward)
    # projection_dim = 128 (real module value -> lane-dense matmuls)
    # embedding_dim = 256 (real DGI hidden size); raw feature dims are 128
    # stand-ins for the 813 gene features / 1000 ResNet features.
    N, D_GENE, D_GRAPH, E, P = 16, 128, 128, 256, 128

    key = jax.random.PRNGKey(0)
    ks = jax.random.split(key, 6)
    spot_Input = jax.random.normal(ks[0], (N, D_GENE), jnp.float32)     # gene_fts[batch]
    graph_Input = jax.random.normal(ks[1], (N, D_GRAPH), jnp.float32)   # image-encoder fts[batch]
    spot_features = jax.random.normal(ks[2], (N, E), jnp.float32)       # spot DGI embed[batch]
    graph_features = jax.random.normal(ks[3], (N, E), jnp.float32)      # image DGI embed[batch]

    spot_proj_params = init_projection_params(ks[4], E, P)
    image_proj_params = init_projection_params(ks[5], E, P)

    fwd = jax.jit(st_gchb_core_forward)
    loss, align_l, hsic_spot, hsic_img = fwd(
        spot_Input, spot_features, graph_Input, graph_features,
        spot_proj_params, image_proj_params)
    jax.block_until_ready(loss)

    assert bool(jnp.isfinite(loss)), "non-finite loss"
    print("KERNEL_OK")
</pallas_src>

<mosaic_0001>
module attributes {stable_mosaic.version = 11 : i64} {
  func.func @_st_gchb_kernel(%arg0: memref<16x128xf32, #tpu.memory_space<vmem>>, %arg1: memref<16x256xf32, #tpu.memory_space<vmem>>, %arg2: memref<16x128xf32, #tpu.memory_space<vmem>>, %arg3: memref<16x256xf32, #tpu.memory_space<vmem>>, %arg4: memref<256x128xf32, #tpu.memory_space<vmem>>, %arg5: memref<1x128xf32, #tpu.memory_space<vmem>>, %arg6: memref<128x128xf32, #tpu.memory_space<vmem>>, %arg7: memref<1x128xf32, #tpu.memory_space<vmem>>, %arg8: memref<1x128xf32, #tpu.memory_space<vmem>>, %arg9: memref<1x128xf32, #tpu.memory_space<vmem>>, %arg10: memref<256x128xf32, #tpu.memory_space<vmem>>, %arg11: memref<1x128xf32, #tpu.memory_space<vmem>>, %arg12: memref<128x128xf32, #tpu.memory_space<vmem>>, %arg13: memref<1x128xf32, #tpu.memory_space<vmem>>, %arg14: memref<1x128xf32, #tpu.memory_space<vmem>>, %arg15: memref<1x128xf32, #tpu.memory_space<vmem>>, %arg16: memref<4xf32, #tpu.memory_space<smem>>) attributes {dimension_semantics = [], scalar_prefetch = 0 : i64, scratch_operands = 0 : i64, tpu.core_type = #tpu.core_type<tc>} {
    %c0 = arith.constant 0 : index
    %c0_0 = arith.constant 0 : index
    %0 = vector.load %arg1[%c0, %c0_0] : memref<16x256xf32, #tpu.memory_space<vmem>>, vector<16x256xf32>
    %c0_1 = arith.constant 0 : index
    %c0_2 = arith.constant 0 : index
    %1 = vector.load %arg3[%c0_1, %c0_2] : memref<16x256xf32, #tpu.memory_space<vmem>>, vector<16x256xf32>
    %c0_3 = arith.constant 0 : index
    %c0_4 = arith.constant 0 : index
    %2 = vector.load %arg4[%c0_3, %c0_4] : memref<256x128xf32, #tpu.memory_space<vmem>>, vector<256x128xf32>
    %c0_5 = arith.constant 0 : index
    %c0_6 = arith.constant 0 : index
    %3 = vector.load %arg5[%c0_5, %c0_6] : memref<1x128xf32, #tpu.memory_space<vmem>>, vector<1x128xf32>
    %c0_7 = arith.constant 0 : index
    %c0_8 = arith.constant 0 : index
    %4 = vector.load %arg6[%c0_7, %c0_8] : memref<128x128xf32, #tpu.memory_space<vmem>>, vector<128x128xf32>
    %c0_9 = arith.constant 0 : index
    %c0_10 = arith.constant 0 : index
    %5 = vector.load %arg7[%c0_9, %c0_10] : memref<1x128xf32, #tpu.memory_space<vmem>>, vector<1x128xf32>
    %c0_11 = arith.constant 0 : index
    %c0_12 = arith.constant 0 : index
    %6 = vector.load %arg8[%c0_11, %c0_12] : memref<1x128xf32, #tpu.memory_space<vmem>>, vector<1x128xf32>
    %c0_13 = arith.constant 0 : index
    %c0_14 = arith.constant 0 : index
    %7 = vector.load %arg9[%c0_13, %c0_14] : memref<1x128xf32, #tpu.memory_space<vmem>>, vector<1x128xf32>
    %cst = arith.constant dense<0.000000e+00> : vector<16x128xf32>
    %8 = tpu.matmul %0, %2, %cst {dimension_numbers = #tpu.dot_dimension_numbers<[1], [0], [0], [1], [0, 0, 1, 1], [], []>} : vector<16x256xf32>, vector<256x128xf32>, vector<16x128xf32> -> vector<16x128xf32>
    %9 = vector.broadcast %3 : vector<1x128xf32> to vector<16x128xf32>
    %10 = arith.addf %8, %9 : vector<16x128xf32>
    %cst_15 = arith.constant 5.000000e-01 : f32
    %11 = vector.broadcast %cst_15 : f32 to vector<16x128xf32>
    %12 = arith.mulf %11, %10 : vector<16x128xf32>
    %cst_16 = arith.constant 4.471500e-02 : f32
    %13 = vector.broadcast %cst_16 : f32 to vector<16x128xf32>
    %14 = arith.mulf %13, %10 : vector<16x128xf32>
    %15 = arith.mulf %14, %10 : vector<16x128xf32>
    %16 = arith.mulf %15, %10 : vector<16x128xf32>
    %17 = arith.addf %10, %16 : vector<16x128xf32>
    %cst_17 = arith.constant 0.797884583 : f32
    %18 = vector.broadcast %cst_17 : f32 to vector<16x128xf32>
    %19 = arith.mulf %18, %17 : vector<16x128xf32>
    %20 = math.tanh %19 : vector<16x128xf32>
    %cst_18 = arith.constant 1.000000e+00 : f32
    %21 = vector.broadcast %cst_18 : f32 to vector<16x128xf32>
    %22 = arith.addf %21, %20 : vector<16x128xf32>
    %23 = arith.mulf %12, %22 : vector<16x128xf32>
    %cst_19 = arith.constant dense<0.000000e+00> : vector<16x128xf32>
    %24 = tpu.matmul %23, %4, %cst_19 {dimension_numbers = #tpu.dot_dimension_numbers<[1], [0], [0], [1], [0, 0, 1, 1], [], []>} : vector<16x128xf32>, vector<128x128xf32>, vector<16x128xf32> -> vector<16x128xf32>
    %25 = vector.broadcast %5 : vector<1x128xf32> to vector<16x128xf32>
    %26 = arith.addf %24, %25 : vector<16x128xf32>
    %27 = arith.addf %26, %10 : vector<16x128xf32>
    %cst_20 = arith.constant dense<0.000000e+00> : vector<16xf32>
    %28 = vector.multi_reduction <add>, %27, %cst_20 [1] : vector<16x128xf32> to vector<16xf32>
    %29 = vector.shape_cast %28 : vector<16xf32> to vector<16x1xf32>
    %cst_21 = arith.constant 1.280000e+02 : f32
    %30 = vector.broadcast %cst_21 : f32 to vector<16x1xf32>
    %31 = arith.divf %29, %30 : vector<16x1xf32>
    %32 = vector.broadcast %31 : vector<16x1xf32> to vector<16x128xf32>
    %33 = arith.subf %27, %32 : vector<16x128xf32>
    %34 = vector.broadcast %31 : vector<16x1xf32> to vector<16x128xf32>
    %35 = arith.subf %27, %34 : vector<16x128xf32>
    %36 = arith.mulf %33, %35 : vector<16x128xf32>
    %cst_22 = arith.constant dense<0.000000e+00> : vector<16xf32>
    %37 = vector.multi_reduction <add>, %36, %cst_22 [1] : vector<16x128xf32> to vector<16xf32>
    %38 = vector.shape_cast %37 : vector<16xf32> to vector<16x1xf32>
    %cst_23 = arith.constant 1.280000e+02 : f32
    %39 = vector.broadcast %cst_23 : f32 to vector<16x1xf32>
    %40 = arith.divf %38, %39 : vector<16x1xf32>
    %41 = vector.broadcast %31 : vector<16x1xf32> to vector<16x128xf32>
    %42 = arith.subf %27, %41 : vector<16x128xf32>
    %cst_24 = arith.constant 9.99999974E-6 : f32
    %43 = vector.broadcast %cst_24 : f32 to vector<16x1xf32>
    %44 = arith.addf %40, %43 : vector<16x1xf32>
    %45 = math.rsqrt %44 : vector<16x1xf32>
    %46 = vector.broadcast %45 : vector<16x1xf32> to vector<16x128xf32>
    %47 = arith.mulf %42, %46 : vector<16x128xf32>
    %48 = vector.broadcast %6 : vector<1x128xf32> to vector<16x128xf32>
    %49 = arith.mulf %47, %48 : vector<16x128xf32>
    %50 = vector.broadcast %7 : vector<1x128xf32> to vector<16x128xf32>
    %51 = arith.addf %49, %50 : vector<16x128xf32>
    %c0_25 = arith.constant 0 : index
    %c0_26 = arith.constant 0 : index
    %52 = vector.load %arg10[%c0_25, %c0_26] : memref<256x128xf32, #tpu.memory_space<vmem>>, vector<256x128xf32>
    %c0_27 = arith.constant 0 : index
    %c0_28 = arith.constant 0 : index
    %53 = vector.load %arg11[%c0_27, %c0_28] : memref<1x128xf32, #tpu.memory_space<vmem>>, vector<1x128xf32>
    %c0_29 = arith.constant 0 : index
    %c0_30 = arith.constant 0 : index
    %54 = vector.load %arg12[%c0_29, %c0_30] : memref<128x128xf32, #tpu.memory_space<vmem>>, vector<128x128xf32>
    %c0_31 = arith.constant 0 : index
    %c0_32 = arith.constant 0 : index
    %55 = vector.load %arg13[%c0_31, %c0_32] : memref<1x128xf32, #tpu.memory_space<vmem>>, vector<1x128xf32>
    %c0_33 = arith.constant 0 : index
    %c0_34 = arith.constant 0 : index
    %56 = vector.load %arg14[%c0_33, %c0_34] : memref<1x128xf32, #tpu.memory_space<vmem>>, vector<1x128xf32>
    %c0_35 = arith.constant 0 : index
    %c0_36 = arith.constant 0 : index
    %57 = vector.load %arg15[%c0_35, %c0_36] : memref<1x128xf32, #tpu.memory_space<vmem>>, vector<1x128xf32>
    %cst_37 = arith.constant dense<0.000000e+00> : vector<16x128xf32>
    %58 = tpu.matmul %1, %52, %cst_37 {dimension_numbers = #tpu.dot_dimension_numbers<[1], [0], [0], [1], [0, 0, 1, 1], [], []>} : vector<16x256xf32>, vector<256x128xf32>, vector<16x128xf32> -> vector<16x128xf32>
    %59 = vector.broadcast %53 : vector<1x128xf32> to vector<16x128xf32>
    %60 = arith.addf %58, %59 : vector<16x128xf32>
    %cst_38 = arith.constant 5.000000e-01 : f32
    %61 = vector.broadcast %cst_38 : f32 to vector<16x128xf32>
    %62 = arith.mulf %61, %60 : vector<16x128xf32>
    %cst_39 = arith.constant 4.471500e-02 : f32
    %63 = vector.broadcast %cst_39 : f32 to vector<16x128xf32>
    %64 = arith.mulf %63, %60 : vector<16x128xf32>
    %65 = arith.mulf %64, %60 : vector<16x128xf32>
    %66 = arith.mulf %65, %60 : vector<16x128xf32>
    %67 = arith.addf %60, %66 : vector<16x128xf32>
    %cst_40 = arith.constant 0.797884583 : f32
    %68 = vector.broadcast %cst_40 : f32 to vector<16x128xf32>
    %69 = arith.mulf %68, %67 : vector<16x128xf32>
    %70 = math.tanh %69 : vector<16x128xf32>
    %cst_41 = arith.constant 1.000000e+00 : f32
    %71 = vector.broadcast %cst_41 : f32 to vector<16x128xf32>
    %72 = arith.addf %71, %70 : vector<16x128xf32>
    %73 = arith.mulf %62, %72 : vector<16x128xf32>
    %cst_42 = arith.constant dense<0.000000e+00> : vector<16x128xf32>
    %74 = tpu.matmul %73, %54, %cst_42 {dimension_numbers = #tpu.dot_dimension_numbers<[1], [0], [0], [1], [0, 0, 1, 1], [], []>} : vector<16x128xf32>, vector<128x128xf32>, vector<16x128xf32> -> vector<16x128xf32>
    %75 = vector.broadcast %55 : vector<1x128xf32> to vector<16x128xf32>
    %76 = arith.addf %74, %75 : vector<16x128xf32>
    %77 = arith.addf %76, %60 : vector<16x128xf32>
    %cst_43 = arith.constant dense<0.000000e+00> : vector<16xf32>
    %78 = vector.multi_reduction <add>, %77, %cst_43 [1] : vector<16x128xf32> to vector<16xf32>
    %79 = vector.shape_cast %78 : vector<16xf32> to vector<16x1xf32>
    %cst_44 = arith.constant 1.280000e+02 : f32
    %80 = vector.broadcast %cst_44 : f32 to vector<16x1xf32>
    %81 = arith.divf %79, %80 : vector<16x1xf32>
    %82 = vector.broadcast %81 : vector<16x1xf32> to vector<16x128xf32>
    %83 = arith.subf %77, %82 : vector<16x128xf32>
    %84 = vector.broadcast %81 : vector<16x1xf32> to vector<16x128xf32>
    %85 = arith.subf %77, %84 : vector<16x128xf32>
    %86 = arith.mulf %83, %85 : vector<16x128xf32>
    %cst_45 = arith.constant dense<0.000000e+00> : vector<16xf32>
    %87 = vector.multi_reduction <add>, %86, %cst_45 [1] : vector<16x128xf32> to vector<16xf32>
    %88 = vector.shape_cast %87 : vector<16xf32> to vector<16x1xf32>
    %cst_46 = arith.constant 1.280000e+02 : f32
    %89 = vector.broadcast %cst_46 : f32 to vector<16x1xf32>
    %90 = arith.divf %88, %89 : vector<16x1xf32>
    %91 = vector.broadcast %81 : vector<16x1xf32> to vector<16x128xf32>
    %92 = arith.subf %77, %91 : vector<16x128xf32>
    %cst_47 = arith.constant 9.99999974E-6 : f32
    %93 = vector.broadcast %cst_47 : f32 to vector<16x1xf32>
    %94 = arith.addf %90, %93 : vector<16x1xf32>
    %95 = math.rsqrt %94 : vector<16x1xf32>
    %96 = vector.broadcast %95 : vector<16x1xf32> to vector<16x128xf32>
    %97 = arith.mulf %92, %96 : vector<16x128xf32>
    %98 = vector.broadcast %56 : vector<1x128xf32> to vector<16x128xf32>
    %99 = arith.mulf %97, %98 : vector<16x128xf32>
    %100 = vector.broadcast %57 : vector<1x128xf32> to vector<16x128xf32>
    %101 = arith.addf %99, %100 : vector<16x128xf32>
    %c0_48 = arith.constant 0 : index
    %c0_49 = arith.constant 0 : index
    %102 = vector.load %arg0[%c0_48, %c0_49] : memref<16x128xf32, #tpu.memory_space<vmem>>, vector<16x128xf32>
    %103 = arith.mulf %102, %102 : vector<16x128xf32>
    %cst_50 = arith.constant dense<0.000000e+00> : vector<16xf32>
    %104 = vector.multi_reduction <add>, %103, %cst_50 [1] : vector<16x128xf32> to vector<16xf32>
    %105 = vector.shape_cast %104 : vector<16xf32> to vector<16x1xf32>
    %cst_51 = arith.constant dense<0.000000e+00> : vector<16xf32>
    %106 = vector.multi_reduction <add>, %103, %cst_51 [1] : vector<16x128xf32> to vector<16xf32>
    %107 = vector.shape_cast %106 : vector<16xf32> to vector<1x16xf32>
    %108 = vector.broadcast %105 : vector<16x1xf32> to vector<16x16xf32>
    %109 = vector.broadcast %107 : vector<1x16xf32> to vector<16x16xf32>
    %110 = arith.addf %108, %109 : vector<16x16xf32>
    %cst_52 = arith.constant dense<0.000000e+00> : vector<16x16xf32>
    %111 = tpu.matmul %102, %102, %cst_52 {dimension_numbers = #tpu.dot_dimension_numbers<[1], [1], [0], [0], [0, 0, 1, 0], [], []>} : vector<16x128xf32>, vector<16x128xf32>, vector<16x16xf32> -> vector<16x16xf32>
    %cst_53 = arith.constant 2.000000e+00 : f32
    %112 = vector.broadcast %cst_53 : f32 to vector<16x16xf32>
    %113 = arith.mulf %112, %111 : vector<16x16xf32>
    %114 = arith.subf %110, %113 : vector<16x16xf32>
    %cst_54 = arith.constant 0.000000e+00 : f32
    %115 = vector.broadcast %cst_54 : f32 to vector<16x16xf32>
    %116 = arith.maximumf %114, %115 : vector<16x16xf32>
    %cst_55 = arith.constant 0.000000e+00 : f32
    %117 = vector.broadcast %cst_55 : f32 to vector<16x16xf32>
    %118 = arith.subf %117, %116 : vector<16x16xf32>
    %cst_56 = arith.constant 0.00999999977 : f32
    %119 = vector.broadcast %cst_56 : f32 to vector<16x16xf32>
    %120 = arith.mulf %118, %119 : vector<16x16xf32>
    %121 = math.exp %120 : vector<16x16xf32>
    %122 = arith.mulf %0, %0 : vector<16x256xf32>
    %cst_57 = arith.constant dense<0.000000e+00> : vector<16xf32>
    %123 = vector.multi_reduction <add>, %122, %cst_57 [1] : vector<16x256xf32> to vector<16xf32>
    %124 = vector.shape_cast %123 : vector<16xf32> to vector<16x1xf32>
    %cst_58 = arith.constant dense<0.000000e+00> : vector<16xf32>
    %125 = vector.multi_reduction <add>, %122, %cst_58 [1] : vector<16x256xf32> to vector<16xf32>
    %126 = vector.shape_cast %125 : vector<16xf32> to vector<1x16xf32>
    %127 = vector.broadcast %124 : vector<16x1xf32> to vector<16x16xf32>
    %128 = vector.broadcast %126 : vector<1x16xf32> to vector<16x16xf32>
    %129 = arith.addf %127, %128 : vector<16x16xf32>
    %cst_59 = arith.constant dense<0.000000e+00> : vector<16x16xf32>
    %130 = tpu.matmul %0, %0, %cst_59 {dimension_numbers = #tpu.dot_dimension_numbers<[1], [1], [0], [0], [0, 0, 1, 0], [], []>} : vector<16x256xf32>, vector<16x256xf32>, vector<16x16xf32> -> vector<16x16xf32>
    %cst_60 = arith.constant 2.000000e+00 : f32
    %131 = vector.broadcast %cst_60 : f32 to vector<16x16xf32>
    %132 = arith.mulf %131, %130 : vector<16x16xf32>
    %133 = arith.subf %129, %132 : vector<16x16xf32>
    %cst_61 = arith.constant 0.000000e+00 : f32
    %134 = vector.broadcast %cst_61 : f32 to vector<16x16xf32>
    %135 = arith.maximumf %133, %134 : vector<16x16xf32>
    %cst_62 = arith.constant 0.000000e+00 : f32
    %136 = vector.broadcast %cst_62 : f32 to vector<16x16xf32>
    %137 = arith.subf %136, %135 : vector<16x16xf32>
    %cst_63 = arith.constant 0.00999999977 : f32
    %138 = vector.broadcast %cst_63 : f32 to vector<16x16xf32>
    %139 = arith.mulf %137, %138 : vector<16x16xf32>
    %140 = math.exp %139 : vector<16x16xf32>
    %141 = arith.mulf %51, %51 : vector<16x128xf32>
    %cst_64 = arith.constant dense<0.000000e+00> : vector<16xf32>
    %142 = vector.multi_reduction <add>, %141, %cst_64 [1] : vector<16x128xf32> to vector<16xf32>
    %143 = vector.shape_cast %142 : vector<16xf32> to vector<16x1xf32>
    %cst_65 = arith.constant dense<0.000000e+00> : vector<16xf32>
    %144 = vector.multi_reduction <add>, %141, %cst_65 [1] : vector<16x128xf32> to vector<16xf32>
    %145 = vector.shape_cast %144 : vector<16xf32> to vector<1x16xf32>
    %146 = vector.broadcast %143 : vector<16x1xf32> to vector<16x16xf32>
    %147 = vector.broadcast %145 : vector<1x16xf32> to vector<16x16xf32>
    %148 = arith.addf %146, %147 : vector<16x16xf32>
    %cst_66 = arith.constant dense<0.000000e+00> : vector<16x16xf32>
    %149 = tpu.matmul %51, %51, %cst_66 {dimension_numbers = #tpu.dot_dimension_numbers<[1], [1], [0], [0], [0, 0, 1, 0], [], []>} : vector<16x128xf32>, vector<16x128xf32>, vector<16x16xf32> -> vector<16x16xf32>
    %cst_67 = arith.constant 2.000000e+00 : f32
    %150 = vector.broadcast %cst_67 : f32 to vector<16x16xf32>
    %151 = arith.mulf %150, %149 : vector<16x16xf32>
    %152 = arith.subf %148, %151 : vector<16x16xf32>
    %cst_68 = arith.constant 0.000000e+00 : f32
    %153 = vector.broadcast %cst_68 : f32 to vector<16x16xf32>
    %154 = arith.maximumf %152, %153 : vector<16x16xf32>
    %cst_69 = arith.constant 0.000000e+00 : f32
    %155 = vector.broadcast %cst_69 : f32 to vector<16x16xf32>
    %156 = arith.subf %155, %154 : vector<16x16xf32>
    %cst_70 = arith.constant 0.00999999977 : f32
    %157 = vector.broadcast %cst_70 : f32 to vector<16x16xf32>
    %158 = arith.mulf %156, %157 : vector<16x16xf32>
    %159 = math.exp %158 : vector<16x16xf32>
    %c0_71 = arith.constant 0 : index
    %c0_72 = arith.constant 0 : index
    %160 = vector.load %arg2[%c0_71, %c0_72] : memref<16x128xf32, #tpu.memory_space<vmem>>, vector<16x128xf32>
    %161 = arith.mulf %160, %160 : vector<16x128xf32>
    %cst_73 = arith.constant dense<0.000000e+00> : vector<16xf32>
    %162 = vector.multi_reduction <add>, %161, %cst_73 [1] : vector<16x128xf32> to vector<16xf32>
    %163 = vector.shape_cast %162 : vector<16xf32> to vector<16x1xf32>
    %cst_74 = arith.constant dense<0.000000e+00> : vector<16xf32>
    %164 = vector.multi_reduction <add>, %161, %cst_74 [1] : vector<16x128xf32> to vector<16xf32>
    %165 = vector.shape_cast %164 : vector<16xf32> to vector<1x16xf32>
    %166 = vector.broadcast %163 : vector<16x1xf32> to vector<16x16xf32>
    %167 = vector.broadcast %165 : vector<1x16xf32> to vector<16x16xf32>
    %168 = arith.addf %166, %167 : vector<16x16xf32>
    %cst_75 = arith.constant dense<0.000000e+00> : vector<16x16xf32>
    %169 = tpu.matmul %160, %160, %cst_75 {dimension_numbers = #tpu.dot_dimension_numbers<[1], [1], [0], [0], [0, 0, 1, 0], [], []>} : vector<16x128xf32>, vector<16x128xf32>, vector<16x16xf32> -> vector<16x16xf32>
    %cst_76 = arith.constant 2.000000e+00 : f32
    %170 = vector.broadcast %cst_76 : f32 to vector<16x16xf32>
    %171 = arith.mulf %170, %169 : vector<16x16xf32>
    %172 = arith.subf %168, %171 : vector<16x16xf32>
    %cst_77 = arith.constant 0.000000e+00 : f32
    %173 = vector.broadcast %cst_77 : f32 to vector<16x16xf32>
    %174 = arith.maximumf %172, %173 : vector<16x16xf32>
    %cst_78 = arith.constant 0.000000e+00 : f32
    %175 = vector.broadcast %cst_78 : f32 to vector<16x16xf32>
    %176 = arith.subf %175, %174 : vector<16x16xf32>
    %cst_79 = arith.constant 0.00999999977 : f32
    %177 = vector.broadcast %cst_79 : f32 to vector<16x16xf32>
    %178 = arith.mulf %176, %177 : vector<16x16xf32>
    %179 = math.exp %178 : vector<16x16xf32>
    %180 = arith.mulf %1, %1 : vector<16x256xf32>
    %cst_80 = arith.constant dense<0.000000e+00> : vector<16xf32>
    %181 = vector.multi_reduction <add>, %180, %cst_80 [1] : vector<16x256xf32> to vector<16xf32>
    %182 = vector.shape_cast %181 : vector<16xf32> to vector<16x1xf32>
    %cst_81 = arith.constant dense<0.000000e+00> : vector<16xf32>
    %183 = vector.multi_reduction <add>, %180, %cst_81 [1] : vector<16x256xf32> to vector<16xf32>
    %184 = vector.shape_cast %183 : vector<16xf32> to vector<1x16xf32>
    %185 = vector.broadcast %182 : vector<16x1xf32> to vector<16x16xf32>
    %186 = vector.broadcast %184 : vector<1x16xf32> to vector<16x16xf32>
    %187 = arith.addf %185, %186 : vector<16x16xf32>
    %cst_82 = arith.constant dense<0.000000e+00> : vector<16x16xf32>
    %188 = tpu.matmul %1, %1, %cst_82 {dimension_numbers = #tpu.dot_dimension_numbers<[1], [1], [0], [0], [0, 0, 1, 0], [], []>} : vector<16x256xf32>, vector<16x256xf32>, vector<16x16xf32> -> vector<16x16xf32>
    %cst_83 = arith.constant 2.000000e+00 : f32
    %189 = vector.broadcast %cst_83 : f32 to vector<16x16xf32>
    %190 = arith.mulf %189, %188 : vector<16x16xf32>
    %191 = arith.subf %187, %190 : vector<16x16xf32>
    %cst_84 = arith.constant 0.000000e+00 : f32
    %192 = vector.broadcast %cst_84 : f32 to vector<16x16xf32>
    %193 = arith.maximumf %191, %192 : vector<16x16xf32>
    %cst_85 = arith.constant 0.000000e+00 : f32
    %194 = vector.broadcast %cst_85 : f32 to vector<16x16xf32>
    %195 = arith.subf %194, %193 : vector<16x16xf32>
    %cst_86 = arith.constant 0.00999999977 : f32
    %196 = vector.broadcast %cst_86 : f32 to vector<16x16xf32>
    %197 = arith.mulf %195, %196 : vector<16x16xf32>
    %198 = math.exp %197 : vector<16x16xf32>
    %199 = arith.mulf %101, %101 : vector<16x128xf32>
    %cst_87 = arith.constant dense<0.000000e+00> : vector<16xf32>
    %200 = vector.multi_reduction <add>, %199, %cst_87 [1] : vector<16x128xf32> to vector<16xf32>
    %201 = vector.shape_cast %200 : vector<16xf32> to vector<16x1xf32>
    %cst_88 = arith.constant dense<0.000000e+00> : vector<16xf32>
    %202 = vector.multi_reduction <add>, %199, %cst_88 [1] : vector<16x128xf32> to vector<16xf32>
    %203 = vector.shape_cast %202 : vector<16xf32> to vector<1x16xf32>
    %204 = vector.broadcast %201 : vector<16x1xf32> to vector<16x16xf32>
    %205 = vector.broadcast %203 : vector<1x16xf32> to vector<16x16xf32>
    %206 = arith.addf %204, %205 : vector<16x16xf32>
    %cst_89 = arith.constant dense<0.000000e+00> : vector<16x16xf32>
    %207 = tpu.matmul %101, %101, %cst_89 {dimension_numbers = #tpu.dot_dimension_numbers<[1], [1], [0], [0], [0, 0, 1, 0], [], []>} : vector<16x128xf32>, vector<16x128xf32>, vector<16x16xf32> -> vector<16x16xf32>
    %cst_90 = arith.constant 2.000000e+00 : f32
    %208 = vector.broadcast %cst_90 : f32 to vector<16x16xf32>
    %209 = arith.mulf %208, %207 : vector<16x16xf32>
    %210 = arith.subf %206, %209 : vector<16x16xf32>
    %cst_91 = arith.constant 0.000000e+00 : f32
    %211 = vector.broadcast %cst_91 : f32 to vector<16x16xf32>
    %212 = arith.maximumf %210, %211 : vector<16x16xf32>
    %cst_92 = arith.constant 0.000000e+00 : f32
    %213 = vector.broadcast %cst_92 : f32 to vector<16x16xf32>
    %214 = arith.subf %213, %212 : vector<16x16xf32>
    %cst_93 = arith.constant 0.00999999977 : f32
    %215 = vector.broadcast %cst_93 : f32 to vector<16x16xf32>
    %216 = arith.mulf %214, %215 : vector<16x16xf32>
    %217 = math.exp %216 : vector<16x16xf32>
    %cst_94 = arith.constant dense<0.000000e+00> : vector<16xf32>
    %218 = vector.multi_reduction <add>, %121, %cst_94 [1] : vector<16x16xf32> to vector<16xf32>
    %219 = vector.shape_cast %218 : vector<16xf32> to vector<16x1xf32>
    %cst_95 = arith.constant 1.600000e+01 : f32
    %220 = vector.broadcast %cst_95 : f32 to vector<16x1xf32>
    %221 = arith.divf %219, %220 : vector<16x1xf32>
    %cst_96 = arith.constant dense<0.000000e+00> : vector<16xf32>
    %222 = vector.multi_reduction <add>, %121, %cst_96 [0] : vector<16x16xf32> to vector<16xf32>
    %223 = vector.shape_cast %222 : vector<16xf32> to vector<1x16xf32>
    %cst_97 = arith.constant 1.600000e+01 : f32
    %224 = vector.broadcast %cst_97 : f32 to vector<1x16xf32>
    %225 = arith.divf %223, %224 : vector<1x16xf32>
    %cst_98 = arith.constant dense<0.000000e+00> : vector<1xf32>
    %226 = vector.multi_reduction <add>, %225, %cst_98 [1] : vector<1x16xf32> to vector<1xf32>
    %227 = vector.shape_cast %226 : vector<1xf32> to vector<1x1xf32>
    %cst_99 = arith.constant 1.600000e+01 : f32
    %228 = vector.broadcast %cst_99 : f32 to vector<1x1xf32>
    %229 = arith.divf %227, %228 : vector<1x1xf32>
    %230 = vector.broadcast %221 : vector<16x1xf32> to vector<16x16xf32>
    %231 = arith.subf %121, %230 : vector<16x16xf32>
    %232 = vector.broadcast %225 : vector<1x16xf32> to vector<16x16xf32>
    %233 = arith.subf %231, %232 : vector<16x16xf32>
    %234 = vector.broadcast %229 : vector<1x1xf32> to vector<16x16xf32>
    %235 = arith.addf %233, %234 : vector<16x16xf32>
    %cst_100 = arith.constant dense<0.000000e+00> : vector<16xf32>
    %236 = vector.multi_reduction <add>, %140, %cst_100 [1] : vector<16x16xf32> to vector<16xf32>
    %237 = vector.shape_cast %236 : vector<16xf32> to vector<16x1xf32>
    %cst_101 = arith.constant 1.600000e+01 : f32
    %238 = vector.broadcast %cst_101 : f32 to vector<16x1xf32>
    %239 = arith.divf %237, %238 : vector<16x1xf32>
    %cst_102 = arith.constant dense<0.000000e+00> : vector<16xf32>
    %240 = vector.multi_reduction <add>, %140, %cst_102 [0] : vector<16x16xf32> to vector<16xf32>
    %241 = vector.shape_cast %240 : vector<16xf32> to vector<1x16xf32>
    %cst_103 = arith.constant 1.600000e+01 : f32
    %242 = vector.broadcast %cst_103 : f32 to vector<1x16xf32>
    %243 = arith.divf %241, %242 : vector<1x16xf32>
    %cst_104 = arith.constant dense<0.000000e+00> : vector<1xf32>
    %244 = vector.multi_reduction <add>, %243, %cst_104 [1] : vector<1x16xf32> to vector<1xf32>
    %245 = vector.shape_cast %244 : vector<1xf32> to vector<1x1xf32>
    %cst_105 = arith.constant 1.600000e+01 : f32
    %246 = vector.broadcast %cst_105 : f32 to vector<1x1xf32>
    %247 = arith.divf %245, %246 : vector<1x1xf32>
    %248 = vector.broadcast %239 : vector<16x1xf32> to vector<16x16xf32>
    %249 = arith.subf %140, %248 : vector<16x16xf32>
    %250 = vector.broadcast %243 : vector<1x16xf32> to vector<16x16xf32>
    %251 = arith.subf %249, %250 : vector<16x16xf32>
    %252 = vector.broadcast %247 : vector<1x1xf32> to vector<16x16xf32>
    %253 = arith.addf %251, %252 : vector<16x16xf32>
    %cst_106 = arith.constant dense<0.000000e+00> : vector<16xf32>
    %254 = vector.multi_reduction <add>, %159, %cst_106 [1] : vector<16x16xf32> to vector<16xf32>
    %255 = vector.shape_cast %254 : vector<16xf32> to vector<16x1xf32>
    %cst_107 = arith.constant 1.600000e+01 : f32
    %256 = vector.broadcast %cst_107 : f32 to vector<16x1xf32>
    %257 = arith.divf %255, %256 : vector<16x1xf32>
    %cst_108 = arith.constant dense<0.000000e+00> : vector<16xf32>
    %258 = vector.multi_reduction <add>, %159, %cst_108 [0] : vector<16x16xf32> to vector<16xf32>
    %259 = vector.shape_cast %258 : vector<16xf32> to vector<1x16xf32>
    %cst_109 = arith.constant 1.600000e+01 : f32
    %260 = vector.broadcast %cst_109 : f32 to vector<1x16xf32>
    %261 = arith.divf %259, %260 : vector<1x16xf32>
    %cst_110 = arith.constant dense<0.000000e+00> : vector<1xf32>
    %262 = vector.multi_reduction <add>, %261, %cst_110 [1] : vector<1x16xf32> to vector<1xf32>
    %263 = vector.shape_cast %262 : vector<1xf32> to vector<1x1xf32>
    %cst_111 = arith.constant 1.600000e+01 : f32
    %264 = vector.broadcast %cst_111 : f32 to vector<1x1xf32>
    %265 = arith.divf %263, %264 : vector<1x1xf32>
    %266 = vector.broadcast %257 : vector<16x1xf32> to vector<16x16xf32>
    %267 = arith.subf %159, %266 : vector<16x16xf32>
    %268 = vector.broadcast %261 : vector<1x16xf32> to vector<16x16xf32>
    %269 = arith.subf %267, %268 : vector<16x16xf32>
    %270 = vector.broadcast %265 : vector<1x1xf32> to vector<16x16xf32>
    %271 = arith.addf %269, %270 : vector<16x16xf32>
    %cst_112 = arith.constant dense<0.000000e+00> : vector<16xf32>
    %272 = vector.multi_reduction <add>, %179, %cst_112 [1] : vector<16x16xf32> to vector<16xf32>
    %273 = vector.shape_cast %272 : vector<16xf32> to vector<16x1xf32>
    %cst_113 = arith.constant 1.600000e+01 : f32
    %274 = vector.broadcast %cst_113 : f32 to vector<16x1xf32>
    %275 = arith.divf %273, %274 : vector<16x1xf32>
    %cst_114 = arith.constant dense<0.000000e+00> : vector<16xf32>
    %276 = vector.multi_reduction <add>, %179, %cst_114 [0] : vector<16x16xf32> to vector<16xf32>
    %277 = vector.shape_cast %276 : vector<16xf32> to vector<1x16xf32>
    %cst_115 = arith.constant 1.600000e+01 : f32
    %278 = vector.broadcast %cst_115 : f32 to vector<1x16xf32>
    %279 = arith.divf %277, %278 : vector<1x16xf32>
    %cst_116 = arith.constant dense<0.000000e+00> : vector<1xf32>
    %280 = vector.multi_reduction <add>, %279, %cst_116 [1] : vector<1x16xf32> to vector<1xf32>
    %281 = vector.shape_cast %280 : vector<1xf32> to vector<1x1xf32>
    %cst_117 = arith.constant 1.600000e+01 : f32
    %282 = vector.broadcast %cst_117 : f32 to vector<1x1xf32>
    %283 = arith.divf %281, %282 : vector<1x1xf32>
    %284 = vector.broadcast %275 : vector<16x1xf32> to vector<16x16xf32>
    %285 = arith.subf %179, %284 : vector<16x16xf32>
    %286 = vector.broadcast %279 : vector<1x16xf32> to vector<16x16xf32>
    %287 = arith.subf %285, %286 : vector<16x16xf32>
    %288 = vector.broadcast %283 : vector<1x1xf32> to vector<16x16xf32>
    %289 = arith.addf %287, %288 : vector<16x16xf32>
    %cst_118 = arith.constant dense<0.000000e+00> : vector<16xf32>
    %290 = vector.multi_reduction <add>, %198, %cst_118 [1] : vector<16x16xf32> to vector<16xf32>
    %291 = vector.shape_cast %290 : vector<16xf32> to vector<16x1xf32>
    %cst_119 = arith.constant 1.600000e+01 : f32
    %292 = vector.broadcast %cst_119 : f32 to vector<16x1xf32>
    %293 = arith.divf %291, %292 : vector<16x1xf32>
    %cst_120 = arith.constant dense<0.000000e+00> : vector<16xf32>
    %294 = vector.multi_reduction <add>, %198, %cst_120 [0] : vector<16x16xf32> to vector<16xf32>
    %295 = vector.shape_cast %294 : vector<16xf32> to vector<1x16xf32>
    %cst_121 = arith.constant 1.600000e+01 : f32
    %296 = vector.broadcast %cst_121 : f32 to vector<1x16xf32>
    %297 = arith.divf %295, %296 : vector<1x16xf32>
    %cst_122 = arith.constant dense<0.000000e+00> : vector<1xf32>
    %298 = vector.multi_reduction <add>, %297, %cst_122 [1] : vector<1x16xf32> to vector<1xf32>
    %299 = vector.shape_cast %298 : vector<1xf32> to vector<1x1xf32>
    %cst_123 = arith.constant 1.600000e+01 : f32
    %300 = vector.broadcast %cst_123 : f32 to vector<1x1xf32>
    %301 = arith.divf %299, %300 : vector<1x1xf32>
    %302 = vector.broadcast %293 : vector<16x1xf32> to vector<16x16xf32>
    %303 = arith.subf %198, %302 : vector<16x16xf32>
    %304 = vector.broadcast %297 : vector<1x16xf32> to vector<16x16xf32>
    %305 = arith.subf %303, %304 : vector<16x16xf32>
    %306 = vector.broadcast %301 : vector<1x1xf32> to vector<16x16xf32>
    %307 = arith.addf %305, %306 : vector<16x16xf32>
    %308 = arith.mulf %235, %140 : vector<16x16xf32>
    %cst_124 = arith.constant dense<0.000000e+00> : vector<16xf32>
    %309 = vector.multi_reduction <add>, %308, %cst_124 [1] : vector<16x16xf32> to vector<16xf32>
    %310 = vector.shape_cast %309 : vector<16xf32> to vector<16x1xf32>
    %cst_125 = arith.constant dense<0.000000e+00> : vector<1xf32>
    %311 = vector.multi_reduction <add>, %310, %cst_125 [0] : vector<16x1xf32> to vector<1xf32>
    %312 = vector.shape_cast %311 : vector<1xf32> to vector<1x1xf32>
    %cst_126 = arith.constant 0.00444444455 : f32
    %313 = vector.broadcast %cst_126 : f32 to vector<1x1xf32>
    %314 = arith.mulf %312, %313 : vector<1x1xf32>
    %315 = arith.mulf %235, %121 : vector<16x16xf32>
    %cst_127 = arith.constant dense<0.000000e+00> : vector<16xf32>
    %316 = vector.multi_reduction <add>, %315, %cst_127 [1] : vector<16x16xf32> to vector<16xf32>
    %317 = vector.shape_cast %316 : vector<16xf32> to vector<16x1xf32>
    %cst_128 = arith.constant dense<0.000000e+00> : vector<1xf32>
    %318 = vector.multi_reduction <add>, %317, %cst_128 [0] : vector<16x1xf32> to vector<1xf32>
    %319 = vector.shape_cast %318 : vector<1xf32> to vector<1x1xf32>
    %cst_129 = arith.constant 0.00444444455 : f32
    %320 = vector.broadcast %cst_129 : f32 to vector<1x1xf32>
    %321 = arith.mulf %319, %320 : vector<1x1xf32>
    %322 = arith.mulf %253, %140 : vector<16x16xf32>
    %cst_130 = arith.constant dense<0.000000e+00> : vector<16xf32>
    %323 = vector.multi_reduction <add>, %322, %cst_130 [1] : vector<16x16xf32> to vector<16xf32>
    %324 = vector.shape_cast %323 : vector<16xf32> to vector<16x1xf32>
    %cst_131 = arith.constant dense<0.000000e+00> : vector<1xf32>
    %325 = vector.multi_reduction <add>, %324, %cst_131 [0] : vector<16x1xf32> to vector<1xf32>
    %326 = vector.shape_cast %325 : vector<1xf32> to vector<1x1xf32>
    %cst_132 = arith.constant 0.00444444455 : f32
    %327 = vector.broadcast %cst_132 : f32 to vector<1x1xf32>
    %328 = arith.mulf %326, %327 : vector<1x1xf32>
    %329 = arith.mulf %271, %140 : vector<16x16xf32>
    %cst_133 = arith.constant dense<0.000000e+00> : vector<16xf32>
    %330 = vector.multi_reduction <add>, %329, %cst_133 [1] : vector<16x16xf32> to vector<16xf32>
    %331 = vector.shape_cast %330 : vector<16xf32> to vector<16x1xf32>
    %cst_134 = arith.constant dense<0.000000e+00> : vector<1xf32>
    %332 = vector.multi_reduction <add>, %331, %cst_134 [0] : vector<16x1xf32> to vector<1xf32>
    %333 = vector.shape_cast %332 : vector<1xf32> to vector<1x1xf32>
    %cst_135 = arith.constant 0.00444444455 : f32
    %334 = vector.broadcast %cst_135 : f32 to vector<1x1xf32>
    %335 = arith.mulf %333, %334 : vector<1x1xf32>
    %336 = arith.mulf %271, %159 : vector<16x16xf32>
    %cst_136 = arith.constant dense<0.000000e+00> : vector<16xf32>
    %337 = vector.multi_reduction <add>, %336, %cst_136 [1] : vector<16x16xf32> to vector<16xf32>
    %338 = vector.shape_cast %337 : vector<16xf32> to vector<16x1xf32>
    %cst_137 = arith.constant dense<0.000000e+00> : vector<1xf32>
    %339 = vector.multi_reduction <add>, %338, %cst_137 [0] : vector<16x1xf32> to vector<1xf32>
    %340 = vector.shape_cast %339 : vector<1xf32> to vector<1x1xf32>
    %cst_138 = arith.constant 0.00444444455 : f32
    %341 = vector.broadcast %cst_138 : f32 to vector<1x1xf32>
    %342 = arith.mulf %340, %341 : vector<1x1xf32>
    %343 = arith.mulf %289, %198 : vector<16x16xf32>
    %cst_139 = arith.constant dense<0.000000e+00> : vector<16xf32>
    %344 = vector.multi_reduction <add>, %343, %cst_139 [1] : vector<16x16xf32> to vector<16xf32>
    %345 = vector.shape_cast %344 : vector<16xf32> to vector<16x1xf32>
    %cst_140 = arith.constant dense<0.000000e+00> : vector<1xf32>
    %346 = vector.multi_reduction <add>, %345, %cst_140 [0] : vector<16x1xf32> to vector<1xf32>
    %347 = vector.shape_cast %346 : vector<1xf32> to vector<1x1xf32>
    %cst_141 = arith.constant 0.00444444455 : f32
    %348 = vector.broadcast %cst_141 : f32 to vector<1x1xf32>
    %349 = arith.mulf %347, %348 : vector<1x1xf32>
    %350 = arith.mulf %289, %179 : vector<16x16xf32>
    %cst_142 = arith.constant dense<0.000000e+00> : vector<16xf32>
    %351 = vector.multi_reduction <add>, %350, %cst_142 [1] : vector<16x16xf32> to vector<16xf32>
    %352 = vector.shape_cast %351 : vector<16xf32> to vector<16x1xf32>
    %cst_143 = arith.constant dense<0.000000e+00> : vector<1xf32>
    %353 = vector.multi_reduction <add>, %352, %cst_143 [0] : vector<16x1xf32> to vector<1xf32>
    %354 = vector.shape_cast %353 : vector<1xf32> to vector<1x1xf32>
    %cst_144 = arith.constant 0.00444444455 : f32
    %355 = vector.broadcast %cst_144 : f32 to vector<1x1xf32>
    %356 = arith.mulf %354, %355 : vector<1x1xf32>
    %357 = arith.mulf %307, %198 : vector<16x16xf32>
    %cst_145 = arith.constant dense<0.000000e+00> : vector<16xf32>
    %358 = vector.multi_reduction <add>, %357, %cst_145 [1] : vector<16x16xf32> to vector<16xf32>
    %359 = vector.shape_cast %358 : vector<16xf32> to vector<16x1xf32>
    %cst_146 = arith.constant dense<0.000000e+00> : vector<1xf32>
    %360 = vector.multi_reduction <add>, %359, %cst_146 [0] : vector<16x1xf32> to vector<1xf32>
    %361 = vector.shape_cast %360 : vector<1xf32> to vector<1x1xf32>
    %cst_147 = arith.constant 0.00444444455 : f32
    %362 = vector.broadcast %cst_147 : f32 to vector<1x1xf32>
    %363 = arith.mulf %361, %362 : vector<1x1xf32>
    %364 = arith.mulf %307, %217 : vector<16x16xf32>
    %cst_148 = arith.constant dense<0.000000e+00> : vector<16xf32>
    %365 = vector.multi_reduction <add>, %364, %cst_148 [1] : vector<16x16xf32> to vector<16xf32>
    %366 = vector.shape_cast %365 : vector<16xf32> to vector<16x1xf32>
    %cst_149 = arith.constant dense<0.000000e+00> : vector<1xf32>
    %367 = vector.multi_reduction <add>, %366, %cst_149 [0] : vector<16x1xf32> to vector<1xf32>
    %368 = vector.shape_cast %367 : vector<1xf32> to vector<1x1xf32>
    %cst_150 = arith.constant 0.00444444455 : f32
    %369 = vector.broadcast %cst_150 : f32 to vector<1x1xf32>
    %370 = arith.mulf %368, %369 : vector<1x1xf32>
    %cst_151 = arith.constant 1.000000e+00 : f32
    %371 = vector.broadcast %cst_151 : f32 to vector<1x1xf32>
    %372 = arith.addf %371, %321 : vector<1x1xf32>
    %cst_152 = arith.constant 1.000000e+00 : f32
    %373 = vector.broadcast %cst_152 : f32 to vector<1x1xf32>
    %374 = arith.addf %373, %328 : vector<1x1xf32>
    %375 = arith.mulf %372, %374 : vector<1x1xf32>
    %376 = math.rsqrt %375 : vector<1x1xf32>
    %377 = arith.mulf %314, %376 : vector<1x1xf32>
    %cst_153 = arith.constant 1.000000e+00 : f32
    %378 = vector.broadcast %cst_153 : f32 to vector<1x1xf32>
    %379 = arith.addf %378, %342 : vector<1x1xf32>
    %cst_154 = arith.constant 1.000000e+00 : f32
    %380 = vector.broadcast %cst_154 : f32 to vector<1x1xf32>
    %381 = arith.addf %380, %328 : vector<1x1xf32>
    %382 = arith.mulf %379, %381 : vector<1x1xf32>
    %383 = math.rsqrt %382 : vector<1x1xf32>
    %384 = arith.mulf %335, %383 : vector<1x1xf32>
    %cst_155 = arith.constant 1.000000e+00 : f32
    %385 = vector.broadcast %cst_155 : f32 to vector<1x1xf32>
    %386 = arith.addf %385, %356 : vector<1x1xf32>
    %cst_156 = arith.constant 1.000000e+00 : f32
    %387 = vector.broadcast %cst_156 : f32 to vector<1x1xf32>
    %388 = arith.addf %387, %363 : vector<1x1xf32>
    %389 = arith.mulf %386, %388 : vector<1x1xf32>
    %390 = math.rsqrt %389 : vector<1x1xf32>
    %391 = arith.mulf %349, %390 : vector<1x1xf32>
    %cst_157 = arith.constant 1.000000e-01 : f32
    %392 = vector.broadcast %cst_157 : f32 to vector<1x1xf32>
    %393 = arith.mulf %392, %384 : vector<1x1xf32>
    %394 = arith.subf %377, %393 : vector<1x1xf32>
    %cst_158 = arith.constant 1.000000e-01 : f32
    %395 = vector.broadcast %cst_158 : f32 to vector<1x1xf32>
    %396 = arith.mulf %395, %370 : vector<1x1xf32>
    %397 = arith.subf %391, %396 : vector<1x1xf32>
    %cst_159 = arith.constant dense<0.000000e+00> : vector<16x16xf32>
    %398 = tpu.matmul %51, %101, %cst_159 {dimension_numbers = #tpu.dot_dimension_numbers<[1], [1], [0], [0], [0, 0, 1, 0], [], []>} : vector<16x128xf32>, vector<16x128xf32>, vector<16x16xf32> -> vector<16x16xf32>
    %cst_160 = arith.constant 1.000000e+00 : f32
    %399 = vector.broadcast %cst_160 : f32 to vector<16x16xf32>
    %400 = arith.mulf %398, %399 : vector<16x16xf32>
    %cst_161 = arith.constant dense<0.000000e+00> : vector<16x16xf32>
    %401 = tpu.matmul %101, %101, %cst_161 {dimension_numbers = #tpu.dot_dimension_numbers<[1], [1], [0], [0], [0, 0, 1, 0], [], []>} : vector<16x128xf32>, vector<16x128xf32>, vector<16x16xf32> -> vector<16x16xf32>
    %cst_162 = arith.constant dense<0.000000e+00> : vector<16x16xf32>
    %402 = tpu.matmul %51, %51, %cst_162 {dimension_numbers = #tpu.dot_dimension_numbers<[1], [1], [0], [0], [0, 0, 1, 0], [], []>} : vector<16x128xf32>, vector<16x128xf32>, vector<16x16xf32> -> vector<16x16xf32>
    %403 = arith.addf %401, %402 : vector<16x16xf32>
    %cst_163 = arith.constant 5.000000e-01 : f32
    %404 = vector.broadcast %cst_163 : f32 to vector<16x16xf32>
    %405 = arith.mulf %403, %404 : vector<16x16xf32>
    %cst_164 = arith.constant dense<0xFF800000> : vector<16xf32>
    %406 = vector.multi_reduction <maximumf>, %405, %cst_164 [1] : vector<16x16xf32> to vector<16xf32>
    %407 = vector.shape_cast %406 : vector<16xf32> to vector<16x1xf32>
    %408 = vector.broadcast %407 : vector<16x1xf32> to vector<16x16xf32>
    %409 = arith.subf %405, %408 : vector<16x16xf32>
    %410 = math.exp %409 : vector<16x16xf32>
    %cst_165 = arith.constant dense<0.000000e+00> : vector<16xf32>
    %411 = vector.multi_reduction <add>, %410, %cst_165 [1] : vector<16x16xf32> to vector<16xf32>
    %412 = vector.shape_cast %411 : vector<16xf32> to vector<16x1xf32>
    %413 = vector.broadcast %412 : vector<16x1xf32> to vector<16x16xf32>
    %414 = arith.divf %410, %413 : vector<16x16xf32>
    %cst_166 = arith.constant dense<0xFF800000> : vector<16xf32>
    %415 = vector.multi_reduction <maximumf>, %400, %cst_166 [1] : vector<16x16xf32> to vector<16xf32>
    %416 = vector.shape_cast %415 : vector<16xf32> to vector<16x1xf32>
    %417 = vector.broadcast %416 : vector<16x1xf32> to vector<16x16xf32>
    %418 = arith.subf %400, %417 : vector<16x16xf32>
    %419 = math.exp %418 : vector<16x16xf32>
    %cst_167 = arith.constant dense<0.000000e+00> : vector<16xf32>
    %420 = vector.multi_reduction <add>, %419, %cst_167 [1] : vector<16x16xf32> to vector<16xf32>
    %421 = vector.shape_cast %420 : vector<16xf32> to vector<16x1xf32>
    %422 = math.log %421 : vector<16x1xf32>
    %423 = vector.broadcast %422 : vector<16x1xf32> to vector<16x16xf32>
    %424 = arith.subf %418, %423 : vector<16x16xf32>
    %cst_168 = arith.constant dense<0xFF800000> : vector<16xf32>
    %425 = vector.multi_reduction <maximumf>, %400, %cst_168 [0] : vector<16x16xf32> to vector<16xf32>
    %426 = vector.shape_cast %425 : vector<16xf32> to vector<1x16xf32>
    %427 = vector.broadcast %426 : vector<1x16xf32> to vector<16x16xf32>
    %428 = arith.subf %400, %427 : vector<16x16xf32>
    %429 = math.exp %428 : vector<16x16xf32>
    %cst_169 = arith.constant dense<0.000000e+00> : vector<16xf32>
    %430 = vector.multi_reduction <add>, %429, %cst_169 [0] : vector<16x16xf32> to vector<16xf32>
    %431 = vector.shape_cast %430 : vector<16xf32> to vector<1x16xf32>
    %432 = math.log %431 : vector<1x16xf32>
    %433 = vector.broadcast %432 : vector<1x16xf32> to vector<16x16xf32>
    %434 = arith.subf %428, %433 : vector<16x16xf32>
    %cst_170 = arith.constant 0.000000e+00 : f32
    %435 = vector.broadcast %cst_170 : f32 to vector<16x16xf32>
    %436 = arith.subf %435, %414 : vector<16x16xf32>
    %437 = arith.mulf %436, %424 : vector<16x16xf32>
    %cst_171 = arith.constant dense<0.000000e+00> : vector<16xf32>
    %438 = vector.multi_reduction <add>, %437, %cst_171 [1] : vector<16x16xf32> to vector<16xf32>
    %439 = vector.shape_cast %438 : vector<16xf32> to vector<16x1xf32>
    %cst_172 = arith.constant dense<0.000000e+00> : vector<1xf32>
    %440 = vector.multi_reduction <add>, %439, %cst_172 [0] : vector<16x1xf32> to vector<1xf32>
    %441 = vector.shape_cast %440 : vector<1xf32> to vector<1x1xf32>
    %cst_173 = arith.constant 0.000000e+00 : f32
    %442 = vector.broadcast %cst_173 : f32 to vector<16x16xf32>
    %443 = arith.subf %442, %414 : vector<16x16xf32>
    %444 = arith.mulf %443, %434 : vector<16x16xf32>
    %cst_174 = arith.constant dense<0.000000e+00> : vector<16xf32>
    %445 = vector.multi_reduction <add>, %444, %cst_174 [1] : vector<16x16xf32> to vector<16xf32>
    %446 = vector.shape_cast %445 : vector<16xf32> to vector<16x1xf32>
    %cst_175 = arith.constant dense<0.000000e+00> : vector<1xf32>
    %447 = vector.multi_reduction <add>, %446, %cst_175 [0] : vector<16x1xf32> to vector<1xf32>
    %448 = vector.shape_cast %447 : vector<1xf32> to vector<1x1xf32>
    %449 = arith.addf %441, %448 : vector<1x1xf32>
    %cst_176 = arith.constant 3.125000e-02 : f32
    %450 = vector.broadcast %cst_176 : f32 to vector<1x1xf32>
    %451 = arith.mulf %449, %450 : vector<1x1xf32>
    %452 = arith.addf %451, %394 : vector<1x1xf32>
    %453 = arith.addf %452, %397 : vector<1x1xf32>
    %454 = vector.extract %453[0, 0] : f32 from vector<1x1xf32>
    %c0_177 = arith.constant 0 : index
    %455 = memref.load %arg16[%c0_177] : memref<4xf32, #tpu.memory_space<smem>>
    memref.store %454, %arg16[%c0_177] : memref<4xf32, #tpu.memory_space<smem>>
    %456 = vector.extract %451[0, 0] : f32 from vector<1x1xf32>
    %c1 = arith.constant 1 : index
    %457 = memref.load %arg16[%c1] : memref<4xf32, #tpu.memory_space<smem>>
    memref.store %456, %arg16[%c1] : memref<4xf32, #tpu.memory_space<smem>>
    %458 = vector.extract %394[0, 0] : f32 from vector<1x1xf32>
    %c2 = arith.constant 2 : index
    %459 = memref.load %arg16[%c2] : memref<4xf32, #tpu.memory_space<smem>>
    memref.store %458, %arg16[%c2] : memref<4xf32, #tpu.memory_space<smem>>
    %460 = vector.extract %397[0, 0] : f32 from vector<1x1xf32>
    %c3 = arith.constant 3 : index
    %461 = memref.load %arg16[%c3] : memref<4xf32, #tpu.memory_space<smem>>
    memref.store %460, %arg16[%c3] : memref<4xf32, #tpu.memory_space<smem>>
    return
  }
}

</mosaic_0001>

<llo_original>
// kernel: st_gchb_core_forward.1
$region0: #{st_gchb_core_forward.1}
  #allocation0 [shape = 'u32[]', space=smem, size = 0x4, offset = 0x4, fixed_abs, tag = 'smem constant byte address 0x4 - core index']
  #allocation1 [shape = 'u32[144,128]{1,0:T(1,128)}', space=vmem, size = 0x12000, scoped, tag = 'internal scratch']
  %s0 = inlined_call_operand.hbm [shape: f32[16,128], index: 0, kind: input, shape index: {}]
  %s1 = inlined_call_operand.hbm [shape: f32[16,256], index: 1, kind: input, shape index: {}]
  %s2 = inlined_call_operand.hbm [shape: f32[16,128], index: 2, kind: input, shape index: {}]
  %s3 = inlined_call_operand.hbm [shape: f32[16,256], index: 3, kind: input, shape index: {}]
  %s4 = inlined_call_operand.hbm [shape: f32[256,128], index: 4, kind: input, shape index: {}]
  %s5 = inlined_call_operand.vmem [shape: f32[1,128], index: 5, kind: input, shape index: {}]
  %s6 = inlined_call_operand.hbm [shape: f32[128,128], index: 6, kind: input, shape index: {}]
  %s7 = inlined_call_operand.vmem [shape: f32[1,128], index: 7, kind: input, shape index: {}]
  %s8 = inlined_call_operand.vmem [shape: f32[1,128], index: 8, kind: input, shape index: {}]
  %s9 = inlined_call_operand.vmem [shape: f32[1,128], index: 9, kind: input, shape index: {}]
  %s10 = inlined_call_operand.hbm [shape: f32[256,128], index: 10, kind: input, shape index: {}]
  %s11 = inlined_call_operand.vmem [shape: f32[1,128], index: 11, kind: input, shape index: {}]
  %s12 = inlined_call_operand.hbm [shape: f32[128,128], index: 12, kind: input, shape index: {}]
  %s13 = inlined_call_operand.vmem [shape: f32[1,128], index: 13, kind: input, shape index: {}]
  %s14 = inlined_call_operand.vmem [shape: f32[1,128], index: 14, kind: input, shape index: {}]
  %s15 = inlined_call_operand.vmem [shape: f32[1,128], index: 15, kind: input, shape index: {}]
  %s16 = inlined_call_operand.vmem [shape: f32[4], index: 16, kind: output, shape index: {}]
  %s17 = sld [smem:[#allocation0]]
  $region106: #{st_gchb_core_forward.1} parent=0
    _
  %s19 = ssub.s32 1, %s17
  %s20 = scalar_select 0, %s19, %s17
  $region1: #{st_gchb_core_forward.1} parent=0
    #allocation2 [shape = 'u8[8192]{0}', space=vmem, size = 0x2000, scoped, tag = 'input window, operand 0, single buffered']
    #allocation3 [shape = 's32[1]{0}', space=sflag, size = 0x4, scoped, tag = 'scoped memory for st_gchb_core_forward.1']
    #allocation4 [shape = 's32[1]{0}', space=sflag, size = 0x4, scoped, tag = 'scoped memory for st_gchb_core_forward.1']
    #allocation5 [shape = 'u8[16384]{0}', space=vmem, size = 0x4000, scoped, tag = 'input window, operand 1, single buffered']
    #allocation6 [shape = 's32[1]{0}', space=sflag, size = 0x4, scoped, tag = 'scoped memory for st_gchb_core_forward.1']
    #allocation7 [shape = 'u8[8192]{0}', space=vmem, size = 0x2000, scoped, tag = 'input window, operand 2, single buffered']
    #allocation8 [shape = 'u8[16384]{0}', space=vmem, size = 0x4000, scoped, tag = 'input window, operand 3, single buffered']
    #allocation9 [shape = 's32[1]{0}', space=sflag, size = 0x4, scoped, tag = 'scoped memory for st_gchb_core_forward.1']
    #allocation10 [shape = 'u8[131072]{0}', space=vmem, size = 0x20000, scoped, tag = 'input window, operand 4, single buffered']
    #allocation11 [shape = 'u8[65536]{0}', space=vmem, size = 0x10000, scoped, tag = 'input window, operand 6, single buffered']
    #allocation12 [shape = 's32[1]{0}', space=sflag, size = 0x4, scoped, tag = 'scoped memory for st_gchb_core_forward.1']
    #allocation13 [shape = 'u8[131072]{0}', space=vmem, size = 0x20000, scoped, tag = 'input window, operand 10, single buffered']
    #allocation14 [shape = 'u8[65536]{0}', space=vmem, size = 0x10000, scoped, tag = 'input window, operand 12, single buffered']
    #allocation15 [shape = 's32[1]{0}', space=sflag, size = 0x4, scoped, tag = 'scoped memory for st_gchb_core_forward.1']
    #allocation16 [shape = 'u8[512]{0}', space=smem, size = 0x200, scoped, tag = 'output window, operand 0, single buffered']
    %21 = vsyncpa [#allocation3], 0
    %22 = vsyncpa [#allocation6], 0
    %23 = vsyncpa [#allocation9], 0
    %24 = vsyncpa [#allocation12], 0
    %25 = vsyncpa [#allocation15], 0
    %26 = vsyncpa [#allocation4], 0
    // Predicated region
    $region2: #{st_gchb_core_forward.1} parent=1 // pred_check
      _
    $region3: #{st_gchb_core_forward.1} parent=1 // pred_check_branch
      %28 = sbr.rel (0) target = $region5
    $region4: #{st_gchb_core_forward.1} parent=1 // pred_region
      %s30 = ssub.s32 256, 256
      %31 = vsyncadd [#allocation3], %s30
      %s32 = sshll.u32 [#allocation2], 4
      %s33 = int_to_ptr.vmem [resolvable:$true] %s32
      %38 = dma.hbm_to_vmem [thread:$0]  %s0, 256, %s33, [#allocation3], 128, 128, 8
    $region5: #{st_gchb_core_forward.1} parent=1 // pred_fallthru
      _
    // Predicated region
    $region6: #{st_gchb_core_forward.1} parent=1 // pred_check
      _
    $region7: #{st_gchb_core_forward.1} parent=1 // pred_check_branch
      %40 = sbr.rel (0) target = $region9
    $region8: #{st_gchb_core_forward.1} parent=1 // pred_region
      %s42 = ssub.s32 512, 512
      %43 = vsyncadd [#allocation6], %s42
      %s44 = sshll.u32 [#allocation5], 4
      %s45 = int_to_ptr.vmem [resolvable:$true] %s44
      %50 = dma.hbm_to_vmem [thread:$0]  %s1, 512, %s45, [#allocation6], 256, 256, 16
    $region9: #{st_gchb_core_forward.1} parent=1 // pred_fallthru
      _
    // Predicated region
    $region10: #{st_gchb_core_forward.1} parent=1 // pred_check
      _
    $region11: #{st_gchb_core_forward.1} parent=1 // pred_check_branch
      %52 = sbr.rel (0) target = $region13
    $region12: #{st_gchb_core_forward.1} parent=1 // pred_region
      %s54 = ssub.s32 256, 256
      %55 = vsyncadd [#allocation6], %s54
      %s56 = sshll.u32 [#allocation7], 4
      %s57 = int_to_ptr.vmem [resolvable:$true] %s56
      %62 = dma.hbm_to_vmem [thread:$0]  %s2, 256, %s57, [#allocation6], 128, 128, 8
    $region13: #{st_gchb_core_forward.1} parent=1 // pred_fallthru
      _
    // Predicated region
    $region14: #{st_gchb_core_forward.1} parent=1 // pred_check
      _
    $region15: #{st_gchb_core_forward.1} parent=1 // pred_check_branch
      %64 = sbr.rel (0) target = $region17
    $region16: #{st_gchb_core_forward.1} parent=1 // pred_region
      %s66 = ssub.s32 512, 512
      %67 = vsyncadd [#allocation9], %s66
      %s68 = sshll.u32 [#allocation8], 4
      %s69 = int_to_ptr.vmem [resolvable:$true] %s68
      %74 = dma.hbm_to_vmem [thread:$0]  %s3, 512, %s69, [#allocation9], 256, 256, 16
    $region17: #{st_gchb_core_forward.1} parent=1 // pred_fallthru
      _
    // Predicated region
    $region18: #{st_gchb_core_forward.1} parent=1 // pred_check
      _
    $region19: #{st_gchb_core_forward.1} parent=1 // pred_check_branch
      %76 = sbr.rel (0) target = $region21
    $region20: #{st_gchb_core_forward.1} parent=1 // pred_region
      %s78 = ssub.s32 4096, 4096
      %79 = vsyncadd [#allocation9], %s78
      %s80 = sshll.u32 [#allocation10], 4
      %s81 = int_to_ptr.vmem [resolvable:$true] %s80
      %86 = dma.hbm_to_vmem [thread:$0]  %s4, 4096, %s81, [#allocation9], 128, 128, 8
    $region21: #{st_gchb_core_forward.1} parent=1 // pred_fallthru
      _
    // Predicated region
    $region22: #{st_gchb_core_forward.1} parent=1 // pred_check
      _
    $region23: #{st_gchb_core_forward.1} parent=1 // pred_check_branch
      %88 = sbr.rel (0) target = $region25
    $region24: #{st_gchb_core_forward.1} parent=1 // pred_region
      _
    $region25: #{st_gchb_core_forward.1} parent=1 // pred_fallthru
      _
    // Predicated region
    $region26: #{st_gchb_core_forward.1} parent=1 // pred_check
      _
    $region27: #{st_gchb_core_forward.1} parent=1 // pred_check_branch
      %90 = sbr.rel (0) target = $region29
    $region28: #{st_gchb_core_forward.1} parent=1 // pred_region
      %s92 = ssub.s32 2048, 2048
      %93 = vsyncadd [#allocation12], %s92
      %s94 = sshll.u32 [#allocation11], 4
      %s95 = int_to_ptr.vmem [resolvable:$true] %s94
      %100 = dma.hbm_to_vmem [thread:$0]  %s6, 2048, %s95, [#allocation12], 128, 128, 8
    $region29: #{st_gchb_core_forward.1} parent=1 // pred_fallthru
      _
    // Predicated region
    $region30: #{st_gchb_core_forward.1} parent=1 // pred_check
      _
    $region31: #{st_gchb_core_forward.1} parent=1 // pred_check_branch
      %102 = sbr.rel (0) target = $region33
    $region32: #{st_gchb_core_forward.1} parent=1 // pred_region
      _
    $region33: #{st_gchb_core_forward.1} parent=1 // pred_fallthru
      _
    // Predicated region
    $region34: #{st_gchb_core_forward.1} parent=1 // pred_check
      _
    $region35: #{st_gchb_core_forward.1} parent=1 // pred_check_branch
      %104 = sbr.rel (0) target = $region37
    $region36: #{st_gchb_core_forward.1} parent=1 // pred_region
      _
    $region37: #{st_gchb_core_forward.1} parent=1 // pred_fallthru
      _
    // Predicated region
    $region38: #{st_gchb_core_forward.1} parent=1 // pred_check
      _
    $region39: #{st_gchb_core_forward.1} parent=1 // pred_check_branch
      %106 = sbr.rel (0) target = $region41
    $region40: #{st_gchb_core_forward.1} parent=1 // pred_region
      _
    $region41: #{st_gchb_core_forward.1} parent=1 // pred_fallthru
      _
    // Predicated region
    $region42: #{st_gchb_core_forward.1} parent=1 // pred_check
      _
    $region43: #{st_gchb_core_forward.1} parent=1 // pred_check_branch
      %108 = sbr.rel (0) target = $region45
    $region44: #{st_gchb_core_forward.1} parent=1 // pred_region
      %s110 = ssub.s32 4096, 4096
      %111 = vsyncadd [#allocation12], %s110
      %s112 = sshll.u32 [#allocation13], 4
      %s113 = int_to_ptr.vmem [resolvable:$true] %s112
      %118 = dma.hbm_to_vmem [thread:$0]  %s10, 4096, %s113, [#allocation12], 128, 128, 8
    $region45: #{st_gchb_core_forward.1} parent=1 // pred_fallthru
      _
    // Predicated region
    $region46: #{st_gchb_core_forward.1} parent=1 // pred_check
      _
    $region47: #{st_gchb_core_forward.1} parent=1 // pred_check_branch
      %120 = sbr.rel (0) target = $region49
    $region48: #{st_gchb_core_forward.1} parent=1 // pred_region
      _
    $region49: #{st_gchb_core_forward.1} parent=1 // pred_fallthru
      _
    // Predicated region
    $region50: #{st_gchb_core_forward.1} parent=1 // pred_check
      _
    $region51: #{st_gchb_core_forward.1} parent=1 // pred_check_branch
      %122 = sbr.rel (0) target = $region53
    $region52: #{st_gchb_core_forward.1} parent=1 // pred_region
      %s124 = ssub.s32 2048, 2048
      %125 = vsyncadd [#allocation15], %s124
      %s126 = sshll.u32 [#allocation14], 4
      %s127 = int_to_ptr.vmem [resolvable:$true] %s126
      %132 = dma.hbm_to_vmem [thread:$0]  %s12, 2048, %s127, [#allocation15], 128, 128, 8
    $region53: #{st_gchb_core_forward.1} parent=1 // pred_fallthru
      _
    // Predicated region
    $region54: #{st_gchb_core_forward.1} parent=1 // pred_check
      _
    $region55: #{st_gchb_core_forward.1} parent=1 // pred_check_branch
      %134 = sbr.rel (0) target = $region57
    $region56: #{st_gchb_core_forward.1} parent=1 // pred_region
      _
    $region57: #{st_gchb_core_forward.1} parent=1 // pred_fallthru
      _
    // Predicated region
    $region58: #{st_gchb_core_forward.1} parent=1 // pred_check
      _
    $region59: #{st_gchb_core_forward.1} parent=1 // pred_check_branch
      %136 = sbr.rel (0) target = $region61
    $region60: #{st_gchb_core_forward.1} parent=1 // pred_region
      _
    $region61: #{st_gchb_core_forward.1} parent=1 // pred_fallthru
      _
    // Predicated region
    $region62: #{st_gchb_core_forward.1} parent=1 // pred_check
      _
    $region63: #{st_gchb_core_forward.1} parent=1 // pred_check_branch
      %138 = sbr.rel (0) target = $region65
    $region64: #{st_gchb_core_forward.1} parent=1 // pred_region
      _
    $region65: #{st_gchb_core_forward.1} parent=1 // pred_fallthru
      _
    // Predicated region
    $region66: #{st_gchb_core_forward.1} parent=1 // pred_check
      _
    $region67: #{st_gchb_core_forward.1} parent=1 // pred_check_branch
      %140 = sbr.rel (0) target = $region69
    $region68: #{st_gchb_core_forward.1} parent=1 // pred_region
      %141 = dma.done [#allocation3], 256
    $region69: #{st_gchb_core_forward.1} parent=1 // pred_fallthru
      _
    // Predicated region
    $region70: #{st_gchb_core_forward.1} parent=1 // pred_check
      _
    $region71: #{st_gchb_core_forward.1} parent=1 // pred_check_branch
      %143 = sbr.rel (0) target = $region73
    $region72: #{st_gchb_core_forward.1} parent=1 // pred_region
      %144 = dma.done [#allocation6], 512
    $region73: #{st_gchb_core_forward.1} parent=1 // pred_fallthru
      _
    // Predicated region
    $region74: #{st_gchb_core_forward.1} parent=1 // pred_check
      _
    $region75: #{st_gchb_core_forward.1} parent=1 // pred_check_branch
      %146 = sbr.rel (0) target = $region77
    $region76: #{st_gchb_core_forward.1} parent=1 // pred_region
      %147 = dma.done [#allocation6], 256
    $region77: #{st_gchb_core_forward.1} parent=1 // pred_fallthru
      _
    // Predicated region
    $region78: #{st_gchb_core_forward.1} parent=1 // pred_check
      _
    $region79: #{st_gchb_core_forward.1} parent=1 // pred_check_branch
      %149 = sbr.rel (0) target = $region81
    $region80: #{st_gchb_core_forward.1} parent=1 // pred_region
      %150 = dma.done [#allocation9], 512
    $region81: #{st_gchb_core_forward.1} parent=1 // pred_fallthru
      _
    // Predicated region
    $region82: #{st_gchb_core_forward.1} parent=1 // pred_check
      _
    $region83: #{st_gchb_core_forward.1} parent=1 // pred_check_branch
      %152 = sbr.rel (0) target = $region85
    $region84: #{st_gchb_core_forward.1} parent=1 // pred_region
      %153 = dma.done [#allocation9], 4096
    $region85: #{st_gchb_core_forward.1} parent=1 // pred_fallthru
      _
    // Predicated region
    $region86: #{st_gchb_core_forward.1} parent=1 // pred_check
      _
    $region87: #{st_gchb_core_forward.1} parent=1 // pred_check_branch
      %155 = sbr.rel (0) target = $region89
    $region88: #{st_gchb_core_forward.1} parent=1 // pred_region
      %156 = dma.done [#allocation12], 2048
    $region89: #{st_gchb_core_forward.1} parent=1 // pred_fallthru
      _
    // Predicated region
    $region90: #{st_gchb_core_forward.1} parent=1 // pred_check
      _
    $region91: #{st_gchb_core_forward.1} parent=1 // pred_check_branch
      %158 = sbr.rel (0) target = $region93
    $region92: #{st_gchb_core_forward.1} parent=1 // pred_region
      %159 = dma.done [#allocation12], 4096
    $region93: #{st_gchb_core_forward.1} parent=1 // pred_fallthru
      _
    // Predicated region
    $region94: #{st_gchb_core_forward.1} parent=1 // pred_check
      _
    $region95: #{st_gchb_core_forward.1} parent=1 // pred_check_branch
      %161 = sbr.rel (0) target = $region97
    $region96: #{st_gchb_core_forward.1} parent=1 // pred_region
      %162 = dma.done [#allocation15], 2048
    $region97: #{st_gchb_core_forward.1} parent=1 // pred_fallthru
      _
    %v163 = vld [vmem:[#allocation5] sm:$0xff]
    %v164 = vld [vmem:[#allocation5 + $0x8] sm:$0xff]
    %v165 = vld [vmem:[#allocation5 + $0x10] sm:$0xff]
    %v166 = vld [vmem:[#allocation5 + $0x18] sm:$0xff]
    %v167 = vld [vmem:[#allocation8] sm:$0xff]
    %v168 = vld [vmem:[#allocation8 + $0x8] sm:$0xff]
    %v169 = vld [vmem:[#allocation8 + $0x10] sm:$0xff]
    %v170 = vld [vmem:[#allocation8 + $0x18] sm:$0xff]
    %v171 = vld [vmem:[#allocation10] sm:$0xff]
    %v172 = vld [vmem:[#allocation10 + $0x8] sm:$0xff]
    %v173 = vld [vmem:[#allocation10 + $0x10] sm:$0xff]
    %v174 = vld [vmem:[#allocation10 + $0x18] sm:$0xff]
    %v175 = vld [vmem:[#allocation10 + $0x20] sm:$0xff]
    %v176 = vld [vmem:[#allocation10 + $0x28] sm:$0xff]
    %v177 = vld [vmem:[#allocation10 + $0x30] sm:$0xff]
    %v178 = vld [vmem:[#allocation10 + $0x38] sm:$0xff]
    %v179 = vld [vmem:[#allocation10 + $0x40] sm:$0xff]
    %v180 = vld [vmem:[#allocation10 + $0x48] sm:$0xff]
    %v181 = vld [vmem:[#allocation10 + $0x50] sm:$0xff]
    %v182 = vld [vmem:[#allocation10 + $0x58] sm:$0xff]
    %v183 = vld [vmem:[#allocation10 + $0x60] sm:$0xff]
    %v184 = vld [vmem:[#allocation10 + $0x68] sm:$0xff]
    %v185 = vld [vmem:[#allocation10 + $0x70] sm:$0xff]
    %v186 = vld [vmem:[#allocation10 + $0x78] sm:$0xff]
    %v187 = vld [vmem:[#allocation10 + $0x80] sm:$0xff]
    %v188 = vld [vmem:[#allocation10 + $0x88] sm:$0xff]
    %v189 = vld [vmem:[#allocation10 + $0x90] sm:$0xff]
    %v190 = vld [vmem:[#allocation10 + $0x98] sm:$0xff]
    %v191 = vld [vmem:[#allocation10 + $0xa0] sm:$0xff]
    %v192 = vld [vmem:[#allocation10 + $0xa8] sm:$0xff]
    %v193 = vld [vmem:[#allocation10 + $0xb0] sm:$0xff]
    %v194 = vld [vmem:[#allocation10 + $0xb8] sm:$0xff]
    %v195 = vld [vmem:[#allocation10 + $0xc0] sm:$0xff]
    %v196 = vld [vmem:[#allocation10 + $0xc8] sm:$0xff]
    %v197 = vld [vmem:[#allocation10 + $0xd0] sm:$0xff]
    %v198 = vld [vmem:[#allocation10 + $0xd8] sm:$0xff]
    %v199 = vld [vmem:[#allocation10 + $0xe0] sm:$0xff]
    %v200 = vld [vmem:[#allocation10 + $0xe8] sm:$0xff]
    %v201 = vld [vmem:[#allocation10 + $0xf0] sm:$0xff]
    %v202 = vld [vmem:[#allocation10 + $0xf8] sm:$0xff]
    %v203 = vld [vmem:[%s5] sm:$0x1]
    %v204 = vld [vmem:[#allocation11] sm:$0xff]
    %v205 = vld [vmem:[#allocation11 + $0x8] sm:$0xff]
    %v206 = vld [vmem:[#allocation11 + $0x10] sm:$0xff]
    %v207 = vld [vmem:[#allocation11 + $0x18] sm:$0xff]
    %v208 = vld [vmem:[#allocation11 + $0x20] sm:$0xff]
    %v209 = vld [vmem:[#allocation11 + $0x28] sm:$0xff]
    %v210 = vld [vmem:[#allocation11 + $0x30] sm:$0xff]
    %v211 = vld [vmem:[#allocation11 + $0x38] sm:$0xff]
    %v212 = vld [vmem:[#allocation11 + $0x40] sm:$0xff]
    %v213 = vld [vmem:[#allocation11 + $0x48] sm:$0xff]
    %v214 = vld [vmem:[#allocation11 + $0x50] sm:$0xff]
    %v215 = vld [vmem:[#allocation11 + $0x58] sm:$0xff]
    %v216 = vld [vmem:[#allocation11 + $0x60] sm:$0xff]
    %v217 = vld [vmem:[#allocation11 + $0x68] sm:$0xff]
    %v218 = vld [vmem:[#allocation11 + $0x70] sm:$0xff]
    %v219 = vld [vmem:[#allocation11 + $0x78] sm:$0xff]
    %v220 = vld [vmem:[%s7] sm:$0x1]
    %v221 = vld [vmem:[%s8] sm:$0x1]
    %v222 = vld [vmem:[%s9] sm:$0x1]
    %v224 = vlaneseq
    %v225 = vshrl.u32 %v224, 7
    %v226 = vsub.s32 0, %v225
    %v227 = vrot.slane %v203, %v226
    %229 = vmatprep.subr.mxu0 0.0
    %230 = vmatpush1.msra.mxu0 %v171
    %231 = vmatprep.subr.mxu0 0.0
    %232 = vmatpush1.msra.mxu0 %v172
    %233 = vmatprep.subr.mxu0 0.0
    %234 = vmatpush1.msra.mxu0 %v173
    %235 = vmatprep.subr.mxu0 0.0
    %236 = vmatpush1.msra.mxu0 %v174
    %237 = vmatprep.subr.mxu0 0.0
    %238 = vmatpush1.msra.mxu0 %v175
    %239 = vmatprep.subr.mxu0 0.0
    %240 = vmatpush1.msra.mxu0 %v176
    %241 = vmatprep.subr.mxu0 0.0
    %242 = vmatpush1.msra.mxu0 %v177
    %243 = vmatprep.subr.mxu0 0.0
    %244 = vmatpush1.msra.mxu0 %v178
    %245 = vmatprep.subr.mxu0 0.0
    %246 = vmatpush1.msra.mxu0 %v179
    %247 = vmatprep.subr.mxu0 0.0
    %248 = vmatpush1.msra.mxu0 %v180
    %249 = vmatprep.subr.mxu0 0.0
    %250 = vmatpush1.msra.mxu0 %v181
    %251 = vmatprep.subr.mxu0 0.0
    %252 = vmatpush1.msra.mxu0 %v182
    %253 = vmatprep.subr.mxu0 0.0
    %254 = vmatpush1.msra.mxu0 %v183
    %255 = vmatprep.subr.mxu0 0.0
    %256 = vmatpush1.msra.mxu0 %v184
    %257 = vmatprep.subr.mxu0 0.0
    %258 = vmatpush1.msra.mxu0 %v185
    %259 = vmatprep.subr.mxu0 0.0
    %260 = vmatpush1.msra.mxu0 %v186
    %261 = vmatprep.subr.mxu0 0.0
    %262 = vmatpush1.msra.mxu0 %v187
    %263 = vmatprep.subr.mxu0 0.0
    %264 = vmatpush1.msra.mxu0 %v188
    %265 = vmatprep.subr.mxu0 0.0
    %266 = vmatpush1.msra.mxu0 %v189
    %267 = vmatprep.subr.mxu0 0.0
    %268 = vmatpush1.msra.mxu0 %v190
    %269 = vmatprep.subr.mxu0 0.0
    %270 = vmatpush1.msra.mxu0 %v191
    %271 = vmatprep.subr.mxu0 0.0
    %272 = vmatpush1.msra.mxu0 %v192
    %273 = vmatprep.subr.mxu0 0.0
    %274 = vmatpush1.msra.mxu0 %v193
    %275 = vmatprep.subr.mxu0 0.0
    %276 = vmatpush1.msra.mxu0 %v194
    %277 = vmatprep.subr.mxu0 0.0
    %278 = vmatpush1.msra.mxu0 %v195
    %279 = vmatprep.subr.mxu0 0.0
    %280 = vmatpush1.msra.mxu0 %v196
    %281 = vmatprep.subr.mxu0 0.0
    %282 = vmatpush1.msra.mxu0 %v197
    %283 = vmatprep.subr.mxu0 0.0
    %284 = vmatpush1.msra.mxu0 %v198
    %285 = vmatprep.subr.mxu0 0.0
    %286 = vmatpush1.msra.mxu0 %v199
    %287 = vmatprep.subr.mxu0 0.0
    %288 = vmatpush1.msra.mxu0 %v200
    %289 = vmatprep.subr.mxu0 0.0
    %290 = vmatpush1.msra.mxu0 %v201
    %291 = vmatprep.subr.mxu0 0.0
    %292 = vmatpush1.msra.mxu0 %v202
    %293 = vmatprep.mubr.f32.mxu0 %v164
    %294 = vmatmul.mubr.f32.gmra.mrb[0].mxu0 %v163
    %v295 = vpop.f32.mrb[0].mxu0
    %v296 = vadd.f32 %v227, %v295
    %v297 = vpop.f32.mrb[0].mxu0
    %298 = vmatprep.mubr.f32.mxu0 %v166
    %299 = vmatmul.mubr.f32.gmra.mrb[0].mxu0 %v165
    %v300 = vpop.f32.mrb[0].mxu0
    %v301 = vadd.f32 %v227, %v300
    %v302 = vpop.f32.mrb[0].mxu0
    %303 = vdwg.mxu0
    %v304 = vmul.f32 %v296, 0.5
    %v305 = vmul.f32 %v301, 0.5
    %v306 = vmul.f32 %v296, 0.044715
    %v307 = vmul.f32 %v301, 0.044715
    %v308 = vmul.f32 %v306, %v296
    %v309 = vmul.f32 %v307, %v301
    %v310 = vmul.f32 %v308, %v296
    %v311 = vmul.f32 %v309, %v301
    %v312 = vadd.f32 %v296, %v310
    %v313 = vadd.f32 %v301, %v311
    %v314 = vmul.f32 %v312, 0.7978846
    %v315 = vmul.f32 %v313, 0.7978846
    %v316 = vtanh.pop %v314
    %v317 = vtanh.pop %v315
    %v318 = vadd.f32 %v316, 1.0
    %v319 = vadd.f32 %v317, 1.0
    %v320 = vmul.f32 %v304, %v318
    %v321 = vmul.f32 %v305, %v319
    %v323 = vlaneseq
    %v324 = vshrl.u32 %v323, 7
    %v325 = vsub.s32 0, %v324
    %v326 = vrot.slane %v220, %v325
    %328 = vmatprep.subr.mxu0 0.0
    %329 = vmatpush1.msra.mxu0 %v204
    %330 = vmatprep.subr.mxu0 0.0
    %331 = vmatpush1.msra.mxu0 %v205
    %332 = vmatprep.subr.mxu0 0.0
    %333 = vmatpush1.msra.mxu0 %v206
    %334 = vmatprep.subr.mxu0 0.0
    %335 = vmatpush1.msra.mxu0 %v207
    %336 = vmatprep.subr.mxu0 0.0
    %337 = vmatpush1.msra.mxu0 %v208
    %338 = vmatprep.subr.mxu0 0.0
    %339 = vmatpush1.msra.mxu0 %v209
    %340 = vmatprep.subr.mxu0 0.0
    %341 = vmatpush1.msra.mxu0 %v210
    %342 = vmatprep.subr.mxu0 0.0
    %343 = vmatpush1.msra.mxu0 %v211
    %344 = vmatprep.subr.mxu0 0.0
    %345 = vmatpush1.msra.mxu0 %v212
    %346 = vmatprep.subr.mxu0 0.0
    %347 = vmatpush1.msra.mxu0 %v213
    %348 = vmatprep.subr.mxu0 0.0
    %349 = vmatpush1.msra.mxu0 %v214
    %350 = vmatprep.subr.mxu0 0.0
    %351 = vmatpush1.msra.mxu0 %v215
    %352 = vmatprep.subr.mxu0 0.0
    %353 = vmatpush1.msra.mxu0 %v216
    %354 = vmatprep.subr.mxu0 0.0
    %355 = vmatpush1.msra.mxu0 %v217
    %356 = vmatprep.subr.mxu0 0.0
    %357 = vmatpush1.msra.mxu0 %v218
    %358 = vmatprep.subr.mxu0 0.0
    %359 = vmatpush1.msra.mxu0 %v219
    %360 = vmatprep.subr.mxu0 0.0
    %361 = vmatpush1.msra.mxu0 0.0
    %362 = vmatprep.subr.mxu0 0.0
    %363 = vmatpush1.msra.mxu0 0.0
    %364 = vmatprep.subr.mxu0 0.0
    %365 = vmatpush1.msra.mxu0 0.0
    %366 = vmatprep.subr.mxu0 0.0
    %367 = vmatpush1.msra.mxu0 0.0
    %368 = vmatprep.subr.mxu0 0.0
    %369 = vmatpush1.msra.mxu0 0.0
    %370 = vmatprep.subr.mxu0 0.0
    %371 = vmatpush1.msra.mxu0 0.0
    %372 = vmatprep.subr.mxu0 0.0
    %373 = vmatpush1.msra.mxu0 0.0
    %374 = vmatprep.subr.mxu0 0.0
    %375 = vmatpush1.msra.mxu0 0.0
    %376 = vmatprep.subr.mxu0 0.0
    %377 = vmatpush1.msra.mxu0 0.0
    %378 = vmatprep.subr.mxu0 0.0
    %379 = vmatpush1.msra.mxu0 0.0
    %380 = vmatprep.subr.mxu0 0.0
    %381 = vmatpush1.msra.mxu0 0.0
    %382 = vmatprep.subr.mxu0 0.0
    %383 = vmatpush1.msra.mxu0 0.0
    %384 = vmatprep.subr.mxu0 0.0
    %385 = vmatpush1.msra.mxu0 0.0
    %386 = vmatprep.subr.mxu0 0.0
    %387 = vmatpush1.msra.mxu0 0.0
    %388 = vmatprep.subr.mxu0 0.0
    %389 = vmatpush1.msra.mxu0 0.0
    %390 = vmatprep.subr.mxu0 0.0
    %391 = vmatpush1.msra.mxu0 0.0
    %392 = vmatprep.mubr.f32.mxu0 0.0
    %393 = vmatmul.mubr.f32.gmra.mrb[0].mxu0 %v320
    %v394 = vpop.f32.mrb[0].mxu0
    %v395 = vadd.f32 %v326, %v394
    %v396 = vpop.f32.mrb[0].mxu0
    %397 = vmatprep.mubr.f32.mxu0 0.0
    %398 = vmatmul.mubr.f32.gmra.mrb[0].mxu0 %v321
    %v399 = vpop.f32.mrb[0].mxu0
    %v400 = vadd.f32 %v326, %v399
    %v401 = vpop.f32.mrb[0].mxu0
    %402 = vdwg.mxu0
    %v403 = vadd.f32 %v395, %v296
    %v404 = vadd.f32 %v400, %v301
    %405 = vadd.xlane.f32.xlu0 %v403
    %v406 = vpop.xlane.xlu0 %405
    %407 = vadd.xlane.f32.xlu0 %v404
    %v408 = vpop.xlane.xlu0 %407
    %v409 = vrcp.pop 128.0
    %v410 = vmul.f32 %v406, %v409
    %v411 = vmul.f32 %v408, %v409
    %v412 = vsub.f32 %v403, %v410
    %v413 = vsub.f32 %v404, %v411
    %v414 = vmul.f32 %v412, %v412
    %v415 = vmul.f32 %v413, %v413
    %416 = vadd.xlane.f32.xlu0 %v414
    %v417 = vpop.xlane.xlu0 %416
    %418 = vadd.xlane.f32.xlu0 %v415
    %v419 = vpop.xlane.xlu0 %418
    %v420 = vmul.f32 %v417, %v409
    %v421 = vmul.f32 %v419, %v409
    %v422 = vadd.f32 %v420, 1e-05
    %v423 = vadd.f32 %v421, 1e-05
    %v424 = vrsqrt.pop %v422
    %v425 = vrsqrt.pop %v423
    %v426 = vmul.f32 %v412, %v424
    %v427 = vmul.f32 %v413, %v425
    %v429 = vlaneseq
    %v430 = vshrl.u32 %v429, 7
    %v431 = vsub.s32 0, %v430
    %v432 = vrot.slane %v221, %v431
    %v434 = vmul.f32 %v426, %v432
    %v435 = vmul.f32 %v427, %v432
    %v437 = vlaneseq
    %v438 = vshrl.u32 %v437, 7
    %v439 = vsub.s32 0, %v438
    %v440 = vrot.slane %v222, %v439
    %v442 = vadd.f32 %v434, %v440
    %v443 = vadd.f32 %v435, %v440
    %v444 = vld [vmem:[#allocation13] sm:$0xff]
    %v445 = vld [vmem:[#allocation13 + $0x8] sm:$0xff]
    %v446 = vld [vmem:[#allocation13 + $0x10] sm:$0xff]
    %v447 = vld [vmem:[#allocation13 + $0x18] sm:$0xff]
    %v448 = vld [vmem:[#allocation13 + $0x20] sm:$0xff]
    %v449 = vld [vmem:[#allocation13 + $0x28] sm:$0xff]
    %v450 = vld [vmem:[#allocation13 + $0x30] sm:$0xff]
    %v451 = vld [vmem:[#allocation13 + $0x38] sm:$0xff]
    %v452 = vld [vmem:[#allocation13 + $0x40] sm:$0xff]
    %v453 = vld [vmem:[#allocation13 + $0x48] sm:$0xff]
    %v454 = vld [vmem:[#allocation13 + $0x50] sm:$0xff]
    %v455 = vld [vmem:[#allocation13 + $0x58] sm:$0xff]
    %v456 = vld [vmem:[#allocation13 + $0x60] sm:$0xff]
    %v457 = vld [vmem:[#allocation13 + $0x68] sm:$0xff]
    %v458 = vld [vmem:[#allocation13 + $0x70] sm:$0xff]
    %v459 = vld [vmem:[#allocation13 + $0x78] sm:$0xff]
    %v460 = vld [vmem:[#allocation13 + $0x80] sm:$0xff]
    %v461 = vld [vmem:[#allocation13 + $0x88] sm:$0xff]
    %v462 = vld [vmem:[#allocation13 + $0x90] sm:$0xff]
    %v463 = vld [vmem:[#allocation13 + $0x98] sm:$0xff]
    %v464 = vld [vmem:[#allocation13 + $0xa0] sm:$0xff]
    %v465 = vld [vmem:[#allocation13 + $0xa8] sm:$0xff]
    %v466 = vld [vmem:[#allocation13 + $0xb0] sm:$0xff]
    %v467 = vld [vmem:[#allocation13 + $0xb8] sm:$0xff]
    %v468 = vld [vmem:[#allocation13 + $0xc0] sm:$0xff]
    %v469 = vld [vmem:[#allocation13 + $0xc8] sm:$0xff]
    %v470 = vld [vmem:[#allocation13 + $0xd0] sm:$0xff]
    %v471 = vld [vmem:[#allocation13 + $0xd8] sm:$0xff]
    %v472 = vld [vmem:[#allocation13 + $0xe0] sm:$0xff]
    %v473 = vld [vmem:[#allocation13 + $0xe8] sm:$0xff]
    %v474 = vld [vmem:[#allocation13 + $0xf0] sm:$0xff]
    %v475 = vld [vmem:[#allocation13 + $0xf8] sm:$0xff]
    %v476 = vld [vmem:[%s11] sm:$0x1]
    %v477 = vld [vmem:[#allocation14] sm:$0xff]
    %v478 = vld [vmem:[#allocation14 + $0x8] sm:$0xff]
    %v479 = vld [vmem:[#allocation14 + $0x10] sm:$0xff]
    %v480 = vld [vmem:[#allocation14 + $0x18] sm:$0xff]
    %v481 = vld [vmem:[#allocation14 + $0x20] sm:$0xff]
    %v482 = vld [vmem:[#allocation14 + $0x28] sm:$0xff]
    %v483 = vld [vmem:[#allocation14 + $0x30] sm:$0xff]
    %v484 = vld [vmem:[#allocation14 + $0x38] sm:$0xff]
    %v485 = vld [vmem:[#allocation14 + $0x40] sm:$0xff]
    %v486 = vld [vmem:[#allocation14 + $0x48] sm:$0xff]
    %v487 = vld [vmem:[#allocation14 + $0x50] sm:$0xff]
    %v488 = vld [vmem:[#allocation14 + $0x58] sm:$0xff]
    %v489 = vld [vmem:[#allocation14 + $0x60] sm:$0xff]
    %v490 = vld [vmem:[#allocation14 + $0x68] sm:$0xff]
    %v491 = vld [vmem:[#allocation14 + $0x70] sm:$0xff]
    %v492 = vld [vmem:[#allocation14 + $0x78] sm:$0xff]
    %v493 = vld [vmem:[%s13] sm:$0x1]
    %v494 = vld [vmem:[%s14] sm:$0x1]
    %v495 = vld [vmem:[%s15] sm:$0x1]
    %v497 = vlaneseq
    %v498 = vshrl.u32 %v497, 7
    %v499 = vsub.s32 0, %v498
    %v500 = vrot.slane %v476, %v499
    %502 = vmatprep.subr.mxu0 0.0
    %503 = vmatpush1.msra.mxu0 %v444
    %504 = vmatprep.subr.mxu0 0.0
    %505 = vmatpush1.msra.mxu0 %v445
    %506 = vmatprep.subr.mxu0 0.0
    %507 = vmatpush1.msra.mxu0 %v446
    %508 = vmatprep.subr.mxu0 0.0
    %509 = vmatpush1.msra.mxu0 %v447
    %510 = vmatprep.subr.mxu0 0.0
    %511 = vmatpush1.msra.mxu0 %v448
    %512 = vmatprep.subr.mxu0 0.0
    %513 = vmatpush1.msra.mxu0 %v449
    %514 = vmatprep.subr.mxu0 0.0
    %515 = vmatpush1.msra.mxu0 %v450
    %516 = vmatprep.subr.mxu0 0.0
    %517 = vmatpush1.msra.mxu0 %v451
    %518 = vmatprep.subr.mxu0 0.0
    %519 = vmatpush1.msra.mxu0 %v452
    %520 = vmatprep.subr.mxu0 0.0
    %521 = vmatpush1.msra.mxu0 %v453
    %522 = vmatprep.subr.mxu0 0.0
    %523 = vmatpush1.msra.mxu0 %v454
    %524 = vmatprep.subr.mxu0 0.0
    %525 = vmatpush1.msra.mxu0 %v455
    %526 = vmatprep.subr.mxu0 0.0
    %527 = vmatpush1.msra.mxu0 %v456
    %528 = vmatprep.subr.mxu0 0.0
    %529 = vmatpush1.msra.mxu0 %v457
    %530 = vmatprep.subr.mxu0 0.0
    %531 = vmatpush1.msra.mxu0 %v458
    %532 = vmatprep.subr.mxu0 0.0
    %533 = vmatpush1.msra.mxu0 %v459
    %534 = vmatprep.subr.mxu0 0.0
    %535 = vmatpush1.msra.mxu0 %v460
    %536 = vmatprep.subr.mxu0 0.0
    %537 = vmatpush1.msra.mxu0 %v461
    %538 = vmatprep.subr.mxu0 0.0
    %539 = vmatpush1.msra.mxu0 %v462
    %540 = vmatprep.subr.mxu0 0.0
    %541 = vmatpush1.msra.mxu0 %v463
    %542 = vmatprep.subr.mxu0 0.0
    %543 = vmatpush1.msra.mxu0 %v464
    %544 = vmatprep.subr.mxu0 0.0
    %545 = vmatpush1.msra.mxu0 %v465
    %546 = vmatprep.subr.mxu0 0.0
    %547 = vmatpush1.msra.mxu0 %v466
    %548 = vmatprep.subr.mxu0 0.0
    %549 = vmatpush1.msra.mxu0 %v467
    %550 = vmatprep.subr.mxu0 0.0
    %551 = vmatpush1.msra.mxu0 %v468
    %552 = vmatprep.subr.mxu0 0.0
    %553 = vmatpush1.msra.mxu0 %v469
    %554 = vmatprep.subr.mxu0 0.0
    %555 = vmatpush1.msra.mxu0 %v470
    %556 = vmatprep.subr.mxu0 0.0
    %557 = vmatpush1.msra.mxu0 %v471
    %558 = vmatprep.subr.mxu0 0.0
    %559 = vmatpush1.msra.mxu0 %v472
    %560 = vmatprep.subr.mxu0 0.0
    %561 = vmatpush1.msra.mxu0 %v473
    %562 = vmatprep.subr.mxu0 0.0
    %563 = vmatpush1.msra.mxu0 %v474
    %564 = vmatprep.subr.mxu0 0.0
    %565 = vmatpush1.msra.mxu0 %v475
    %566 = vmatprep.mubr.f32.mxu0 %v168
    %567 = vmatmul.mubr.f32.gmra.mrb[0].mxu0 %v167
    %v568 = vpop.f32.mrb[0].mxu0
    %v569 = vadd.f32 %v500, %v568
    %v570 = vpop.f32.mrb[0].mxu0
    %571 = vmatprep.mubr.f32.mxu0 %v170
    %572 = vmatmul.mubr.f32.gmra.mrb[0].mxu0 %v169
    %v573 = vpop.f32.mrb[0].mxu0
    %v574 = vadd.f32 %v500, %v573
    %v575 = vpop.f32.mrb[0].mxu0
    %576 = vdwg.mxu0
    %v577 = vmul.f32 %v569, 0.5
    %v578 = vmul.f32 %v574, 0.5
    %v579 = vmul.f32 %v569, 0.044715
    %v580 = vmul.f32 %v574, 0.044715
    %v581 = vmul.f32 %v579, %v569
    %v582 = vmul.f32 %v580, %v574
    %v583 = vmul.f32 %v581, %v569
    %v584 = vmul.f32 %v582, %v574
    %v585 = vadd.f32 %v569, %v583
    %v586 = vadd.f32 %v574, %v584
    %v587 = vmul.f32 %v585, 0.7978846
    %v588 = vmul.f32 %v586, 0.7978846
    %v589 = vtanh.pop %v587
    %v590 = vtanh.pop %v588
    %v591 = vadd.f32 %v589, 1.0
    %v592 = vadd.f32 %v590, 1.0
    %v593 = vmul.f32 %v577, %v591
    %v594 = vmul.f32 %v578, %v592
    %v596 = vlaneseq
    %v597 = vshrl.u32 %v596, 7
    %v598 = vsub.s32 0, %v597
    %v599 = vrot.slane %v493, %v598
    %601 = vmatprep.subr.mxu0 0.0
    %602 = vmatpush1.msra.mxu0 %v477
    %603 = vmatprep.subr.mxu0 0.0
    %604 = vmatpush1.msra.mxu0 %v478
    %605 = vmatprep.subr.mxu0 0.0
    %606 = vmatpush1.msra.mxu0 %v479
    %607 = vmatprep.subr.mxu0 0.0
    %608 = vmatpush1.msra.mxu0 %v480
    %609 = vmatprep.subr.mxu0 0.0
    %610 = vmatpush1.msra.mxu0 %v481
    %611 = vmatprep.subr.mxu0 0.0
    %612 = vmatpush1.msra.mxu0 %v482
    %613 = vmatprep.subr.mxu0 0.0
    %614 = vmatpush1.msra.mxu0 %v483
    %615 = vmatprep.subr.mxu0 0.0
    %616 = vmatpush1.msra.mxu0 %v484
    %617 = vmatprep.subr.mxu0 0.0
    %618 = vmatpush1.msra.mxu0 %v485
    %619 = vmatprep.subr.mxu0 0.0
    %620 = vmatpush1.msra.mxu0 %v486
    %621 = vmatprep.subr.mxu0 0.0
    %622 = vmatpush1.msra.mxu0 %v487
    %623 = vmatprep.subr.mxu0 0.0
    %624 = vmatpush1.msra.mxu0 %v488
    %625 = vmatprep.subr.mxu0 0.0
    %626 = vmatpush1.msra.mxu0 %v489
    %627 = vmatprep.subr.mxu0 0.0
    %628 = vmatpush1.msra.mxu0 %v490
    %629 = vmatprep.subr.mxu0 0.0
    %630 = vmatpush1.msra.mxu0 %v491
    %631 = vmatprep.subr.mxu0 0.0
    %632 = vmatpush1.msra.mxu0 %v492
    %633 = vmatprep.subr.mxu0 0.0
    %634 = vmatpush1.msra.mxu0 0.0
    %635 = vmatprep.subr.mxu0 0.0
    %636 = vmatpush1.msra.mxu0 0.0
    %637 = vmatprep.subr.mxu0 0.0
    %638 = vmatpush1.msra.mxu0 0.0
    %639 = vmatprep.subr.mxu0 0.0
    %640 = vmatpush1.msra.mxu0 0.0
    %641 = vmatprep.subr.mxu0 0.0
    %642 = vmatpush1.msra.mxu0 0.0
    %643 = vmatprep.subr.mxu0 0.0
    %644 = vmatpush1.msra.mxu0 0.0
    %645 = vmatprep.subr.mxu0 0.0
    %646 = vmatpush1.msra.mxu0 0.0
    %647 = vmatprep.subr.mxu0 0.0
    %648 = vmatpush1.msra.mxu0 0.0
    %649 = vmatprep.subr.mxu0 0.0
    %650 = vmatpush1.msra.mxu0 0.0
    %651 = vmatprep.subr.mxu0 0.0
    %652 = vmatpush1.msra.mxu0 0.0
    %653 = vmatprep.subr.mxu0 0.0
    %654 = vmatpush1.msra.mxu0 0.0
    %655 = vmatprep.subr.mxu0 0.0
    %656 = vmatpush1.msra.mxu0 0.0
    %657 = vmatprep.subr.mxu0 0.0
    %658 = vmatpush1.msra.mxu0 0.0
    %659 = vmatprep.subr.mxu0 0.0
    %660 = vmatpush1.msra.mxu0 0.0
    %661 = vmatprep.subr.mxu0 0.0
    %662 = vmatpush1.msra.mxu0 0.0
    %663 = vmatprep.subr.mxu0 0.0
    %664 = vmatpush1.msra.mxu0 0.0
    %665 = vmatprep.mubr.f32.mxu0 0.0
    %666 = vmatmul.mubr.f32.gmra.mrb[0].mxu0 %v593
    %v667 = vpop.f32.mrb[0].mxu0
    %v668 = vadd.f32 %v599, %v667
    %v669 = vpop.f32.mrb[0].mxu0
    %670 = vmatprep.mubr.f32.mxu0 0.0
    %671 = vmatmul.mubr.f32.gmra.mrb[0].mxu0 %v594
    %v672 = vpop.f32.mrb[0].mxu0
    %v673 = vadd.f32 %v599, %v672
    %v674 = vpop.f32.mrb[0].mxu0
    %675 = vdwg.mxu0
    %v676 = vadd.f32 %v668, %v569
    %v677 = vadd.f32 %v673, %v574
    %678 = vadd.xlane.f32.xlu0 %v676
    %v679 = vpop.xlane.xlu0 %678
    %680 = vadd.xlane.f32.xlu0 %v677
    %v681 = vpop.xlane.xlu0 %680
    %v682 = vmul.f32 %v679, %v409
    %v683 = vmul.f32 %v681, %v409
    %v684 = vsub.f32 %v676, %v682
    %v685 = vsub.f32 %v677, %v683
    %v686 = vmul.f32 %v684, %v684
    %v687 = vmul.f32 %v685, %v685
    %688 = vadd.xlane.f32.xlu0 %v686
    %v689 = vpop.xlane.xlu0 %688
    %690 = vadd.xlane.f32.xlu0 %v687
    %v691 = vpop.xlane.xlu0 %690
    %v692 = vmul.f32 %v689, %v409
    %v693 = vmul.f32 %v691, %v409
    %v694 = vadd.f32 %v692, 1e-05
    %v695 = vadd.f32 %v693, 1e-05
    %v696 = vrsqrt.pop %v694
    %v697 = vrsqrt.pop %v695
    %v698 = vmul.f32 %v684, %v696
    %v699 = vmul.f32 %v685, %v697
    %v701 = vlaneseq
    %v702 = vshrl.u32 %v701, 7
    %v703 = vsub.s32 0, %v702
    %v704 = vrot.slane %v494, %v703
    %v706 = vmul.f32 %v698, %v704
    %v707 = vmul.f32 %v699, %v704
    %v709 = vlaneseq
    %v710 = vshrl.u32 %v709, 7
    %v711 = vsub.s32 0, %v710
    %v712 = vrot.slane %v495, %v711
    %v714 = vadd.f32 %v706, %v712
    %v715 = vadd.f32 %v707, %v712
    %v716 = vld [vmem:[#allocation2] sm:$0xff]
    %v717 = vld [vmem:[#allocation2 + $0x8] sm:$0xff]
    %v718 = vmul.f32 %v716, %v716
    %v719 = vmul.f32 %v717, %v717
    %720 = vadd.xlane.f32.xlu0 %v718
    %v721 = vpop.xlane.xlu0 %720
    %722 = vadd.xlane.f32.xlu0 %v719
    %v723 = vpop.xlane.xlu0 %722
    %v726 = vlaneseq
    %v727 = vand.u32 %v726, 127
    %v728 = vlaneseq
    %v729 = vshrl.u32 %v728, 7
    %v730 = vsub.s32 %v727, %v729
    %v731 = vrot.slane %v721, %v730
    %v732 = vadd.s32 %v727, 4294967288
    %v733 = vlaneseq
    %v734 = vshrl.u32 %v733, 7
    %v735 = vsub.s32 %v732, %v734
    %v736 = vrot.slane %v723, %v735
    %vm737 = vcmask 130112
    %v738 = vsel %vm737, %v736, %v731
    %vm739 = vcmask 1042434
    %v740 = vsel %vm739, %v738, %v738
    %vm741 = vcmask 1043459
    %v742 = vsel %vm741, %v738, %v740
    %vm743 = vcmask 1044484
    %v744 = vsel %vm743, %v738, %v742
    %vm745 = vcmask 1045509
    %v746 = vsel %vm745, %v738, %v744
    %vm747 = vcmask 1046534
    %v748 = vsel %vm747, %v738, %v746
    %vm749 = vcmask 1047559
    %v750 = vsel %vm749, %v738, %v748
    %v752 = vadd.f32 %v721, %v750
    %v753 = vadd.f32 %v723, %v750
    %754 = vmatprep.subr.mxu0 0.0
    %755 = vmatpush1.xpose.msra.mxu0 %v716
    %756 = vmatprep.subr.mxu0 0.0
    %757 = vmatpush1.xpose.msra.mxu0 %v717
    %758 = vmatprep.subr.mxu0 0.0
    %759 = vmatpush1.xpose.msra.mxu0 0.0
    %760 = vmatprep.subr.mxu0 0.0
    %761 = vmatpush1.xpose.msra.mxu0 0.0
    %762 = vmatprep.subr.mxu0 0.0
    %763 = vmatpush1.xpose.msra.mxu0 0.0
    %764 = vmatprep.subr.mxu0 0.0
    %765 = vmatpush1.xpose.msra.mxu0 0.0
    %766 = vmatprep.subr.mxu0 0.0
    %767 = vmatpush1.xpose.msra.mxu0 0.0
    %768 = vmatprep.subr.mxu0 0.0
    %769 = vmatpush1.xpose.msra.mxu0 0.0
    %770 = vmatprep.subr.mxu0 0.0
    %771 = vmatpush1.xpose.msra.mxu0 0.0
    %772 = vmatprep.subr.mxu0 0.0
    %773 = vmatpush1.xpose.msra.mxu0 0.0
    %774 = vmatprep.subr.mxu0 0.0
    %775 = vmatpush1.xpose.msra.mxu0 0.0
    %776 = vmatprep.subr.mxu0 0.0
    %777 = vmatpush1.xpose.msra.mxu0 0.0
    %778 = vmatprep.subr.mxu0 0.0
    %779 = vmatpush1.xpose.msra.mxu0 0.0
    %780 = vmatprep.subr.mxu0 0.0
    %781 = vmatpush1.xpose.msra.mxu0 0.0
    %782 = vmatprep.subr.mxu0 0.0
    %783 = vmatpush1.xpose.msra.mxu0 0.0
    %784 = vmatprep.subr.mxu0 0.0
    %785 = vmatpush1.xpose.msra.mxu0 0.0
    %786 = vmatprep.subr.mxu0 0.0
    %787 = vmatpush1.xpose.msra.mxu0 0.0
    %788 = vmatprep.subr.mxu0 0.0
    %789 = vmatpush1.xpose.msra.mxu0 0.0
    %790 = vmatprep.subr.mxu0 0.0
    %791 = vmatpush1.xpose.msra.mxu0 0.0
    %792 = vmatprep.subr.mxu0 0.0
    %793 = vmatpush1.xpose.msra.mxu0 0.0
    %794 = vmatprep.subr.mxu0 0.0
    %795 = vmatpush1.xpose.msra.mxu0 0.0
    %796 = vmatprep.subr.mxu0 0.0
    %797 = vmatpush1.xpose.msra.mxu0 0.0
    %798 = vmatprep.subr.mxu0 0.0
    %799 = vmatpush1.xpose.msra.mxu0 0.0
    %800 = vmatprep.subr.mxu0 0.0
    %801 = vmatpush1.xpose.msra.mxu0 0.0
    %802 = vmatprep.subr.mxu0 0.0
    %803 = vmatpush1.xpose.msra.mxu0 0.0
    %804 = vmatprep.subr.mxu0 0.0
    %805 = vmatpush1.xpose.msra.mxu0 0.0
    %806 = vmatprep.subr.mxu0 0.0
    %807 = vmatpush1.xpose.msra.mxu0 0.0
    %808 = vmatprep.subr.mxu0 0.0
    %809 = vmatpush1.xpose.msra.mxu0 0.0
    %810 = vmatprep.subr.mxu0 0.0
    %811 = vmatpush1.xpose.msra.mxu0 0.0
    %812 = vmatprep.subr.mxu0 0.0
    %813 = vmatpush1.xpose.msra.mxu0 0.0
    %814 = vmatprep.subr.mxu0 0.0
    %815 = vmatpush1.xpose.msra.mxu0 0.0
    %816 = vmatprep.subr.mxu0 0.0
    %817 = vmatpush1.xpose.msra.mxu0 0.0
    %818 = vmatprep.mubr.f32.mxu0 0.0
    %819 = vmatmul.mubr.f32.gmra.mrb[0].mxu0 %v716
    %v820 = vpop.f32.mrb[0].mxu0
    %v821 = vadd.f32 0.0, %v820
    %v822 = vpop.f32.mrb[0].mxu0
    %823 = vmatprep.mubr.f32.mxu0 0.0
    %824 = vmatmul.mubr.f32.gmra.mrb[0].mxu0 %v717
    %v825 = vpop.f32.mrb[0].mxu0
    %v826 = vadd.f32 0.0, %v825
    %v827 = vpop.f32.mrb[0].mxu0
    %828 = vdwg.mxu0
    %v829 = vmul.f32 %v821, 2.0
    %v830 = vmul.f32 %v826, 2.0
    %v831 = vsub.f32 %v752, %v829
    %v832 = vsub.f32 %v753, %v830
    %v833 = vmax.f32 %v831, 0.0
    %v834 = vmax.f32 %v832, 0.0
    %v835 = vsub.f32 0.0, %v833
    %v836 = vsub.f32 0.0, %v834
    %v837 = vmul.f32 %v835, 0.01
    %v838 = vmul.f32 %v836, 0.01
    %v839 = vmul.f32 %v837, 1.442695
    %v840 = vpow.pop %v839
    %v841 = vmul.f32 %v838, 1.442695
    %v842 = vpow.pop %v841
    %v843 = vmul.f32 %v163, %v163
    %v844 = vmul.f32 %v164, %v164
    %v845 = vmul.f32 %v165, %v165
    %v846 = vmul.f32 %v166, %v166
    %v847 = vadd.f32 %v843, %v844
    %848 = vadd.xlane.f32.xlu0 %v847
    %v849 = vpop.xlane.xlu0 %848
    %v850 = vadd.f32 %v845, %v846
    %851 = vadd.xlane.f32.xlu0 %v850
    %v852 = vpop.xlane.xlu0 %851
    %v855 = vlaneseq
    %v856 = vshrl.u32 %v855, 7
    %v857 = vsub.s32 %v727, %v856
    %v858 = vrot.slane %v849, %v857
    %v859 = vlaneseq
    %v860 = vshrl.u32 %v859, 7
    %v861 = vsub.s32 %v732, %v860
    %v862 = vrot.slane %v852, %v861
    %v863 = vsel %vm737, %v862, %v858
    %v864 = vsel %vm739, %v863, %v863
    %v865 = vsel %vm741, %v863, %v864
    %v866 = vsel %vm743, %v863, %v865
    %v867 = vsel %vm745, %v863, %v866
    %v868 = vsel %vm747, %v863, %v867
    %v869 = vsel %vm749, %v863, %v868
    %v871 = vadd.f32 %v849, %v869
    %v872 = vadd.f32 %v852, %v869
    %873 = vmatprep.subr.mxu0 %v164
    %874 = vmatpush1.xpose.msra.mxu0 %v163
    %875 = vmatprep.subr.mxu0 %v166
    %876 = vmatpush1.xpose.msra.mxu0 %v165
    %877 = vmatprep.subr.mxu0 0.0
    %878 = vmatpush1.xpose.msra.mxu0 0.0
    %879 = vmatprep.subr.mxu0 0.0
    %880 = vmatpush1.xpose.msra.mxu0 0.0
    %881 = vmatprep.subr.mxu0 0.0
    %882 = vmatpush1.xpose.msra.mxu0 0.0
    %883 = vmatprep.subr.mxu0 0.0
    %884 = vmatpush1.xpose.msra.mxu0 0.0
    %885 = vmatprep.subr.mxu0 0.0
    %886 = vmatpush1.xpose.msra.mxu0 0.0
    %887 = vmatprep.subr.mxu0 0.0
    %888 = vmatpush1.xpose.msra.mxu0 0.0
    %889 = vmatprep.subr.mxu0 0.0
    %890 = vmatpush1.xpose.msra.mxu0 0.0
    %891 = vmatprep.subr.mxu0 0.0
    %892 = vmatpush1.xpose.msra.mxu0 0.0
    %893 = vmatprep.subr.mxu0 0.0
    %894 = vmatpush1.xpose.msra.mxu0 0.0
    %895 = vmatprep.subr.mxu0 0.0
    %896 = vmatpush1.xpose.msra.mxu0 0.0
    %897 = vmatprep.subr.mxu0 0.0
    %898 = vmatpush1.xpose.msra.mxu0 0.0
    %899 = vmatprep.subr.mxu0 0.0
    %900 = vmatpush1.xpose.msra.mxu0 0.0
    %901 = vmatprep.subr.mxu0 0.0
    %902 = vmatpush1.xpose.msra.mxu0 0.0
    %903 = vmatprep.subr.mxu0 0.0
    %904 = vmatpush1.xpose.msra.mxu0 0.0
    %905 = vmatprep.subr.mxu0 0.0
    %906 = vmatpush1.xpose.msra.mxu0 0.0
    %907 = vmatprep.subr.mxu0 0.0
    %908 = vmatpush1.xpose.msra.mxu0 0.0
    %909 = vmatprep.subr.mxu0 0.0
    %910 = vmatpush1.xpose.msra.mxu0 0.0
    %911 = vmatprep.subr.mxu0 0.0
    %912 = vmatpush1.xpose.msra.mxu0 0.0
    %913 = vmatprep.subr.mxu0 0.0
    %914 = vmatpush1.xpose.msra.mxu0 0.0
    %915 = vmatprep.subr.mxu0 0.0
    %916 = vmatpush1.xpose.msra.mxu0 0.0
    %917 = vmatprep.subr.mxu0 0.0
    %918 = vmatpush1.xpose.msra.mxu0 0.0
    %919 = vmatprep.subr.mxu0 0.0
    %920 = vmatpush1.xpose.msra.mxu0 0.0
    %921 = vmatprep.subr.mxu0 0.0
    %922 = vmatpush1.xpose.msra.mxu0 0.0
    %923 = vmatprep.subr.mxu0 0.0
    %924 = vmatpush1.xpose.msra.mxu0 0.0
    %925 = vmatprep.subr.mxu0 0.0
    %926 = vmatpush1.xpose.msra.mxu0 0.0
    %927 = vmatprep.subr.mxu0 0.0
    %928 = vmatpush1.xpose.msra.mxu0 0.0
    %929 = vmatprep.subr.mxu0 0.0
    %930 = vmatpush1.xpose.msra.mxu0 0.0
    %931 = vmatprep.subr.mxu0 0.0
    %932 = vmatpush1.xpose.msra.mxu0 0.0
    %933 = vmatprep.subr.mxu0 0.0
    %934 = vmatpush1.xpose.msra.mxu0 0.0
    %935 = vmatprep.subr.mxu0 0.0
    %936 = vmatpush1.xpose.msra.mxu0 0.0
    %937 = vmatprep.mubr.f32.mxu0 %v164
    %938 = vmatmul.mubr.f32.gmra.mrb[0].mxu0 %v163
    %v939 = vpop.f32.mrb[0].mxu0
    %v940 = vadd.f32 0.0, %v939
    %v941 = vpop.f32.mrb[0].mxu0
    %942 = vmatprep.mubr.f32.mxu0 %v166
    %943 = vmatmul.mubr.f32.gmra.mrb[0].mxu0 %v165
    %v944 = vpop.f32.mrb[0].mxu0
    %v945 = vadd.f32 0.0, %v944
    %v946 = vpop.f32.mrb[0].mxu0
    %947 = vdwg.mxu0
    %v948 = vmul.f32 %v940, 2.0
    %v949 = vmul.f32 %v945, 2.0
    %v950 = vsub.f32 %v871, %v948
    %v951 = vsub.f32 %v872, %v949
    %v952 = vmax.f32 %v950, 0.0
    %v953 = vmax.f32 %v951, 0.0
    %v954 = vsub.f32 0.0, %v952
    %v955 = vsub.f32 0.0, %v953
    %v956 = vmul.f32 %v954, 0.01
    %v957 = vmul.f32 %v955, 0.01
    %v958 = vmul.f32 %v956, 1.442695
    %v959 = vpow.pop %v958
    %v960 = vmul.f32 %v957, 1.442695
    %v961 = vpow.pop %v960
    %v962 = vmul.f32 %v442, %v442
    %v963 = vmul.f32 %v443, %v443
    %964 = vadd.xlane.f32.xlu0 %v962
    %v965 = vpop.xlane.xlu0 %964
    %966 = vadd.xlane.f32.xlu0 %v963
    %v967 = vpop.xlane.xlu0 %966
    %v970 = vlaneseq
    %v971 = vshrl.u32 %v970, 7
    %v972 = vsub.s32 %v727, %v971
    %v973 = vrot.slane %v965, %v972
    %v974 = vlaneseq
    %v975 = vshrl.u32 %v974, 7
    %v976 = vsub.s32 %v732, %v975
    %v977 = vrot.slane %v967, %v976
    %v978 = vsel %vm737, %v977, %v973
    %v979 = vsel %vm739, %v978, %v978
    %v980 = vsel %vm741, %v978, %v979
    %v981 = vsel %vm743, %v978, %v980
    %v982 = vsel %vm745, %v978, %v981
    %v983 = vsel %vm747, %v978, %v982
    %v984 = vsel %vm749, %v978, %v983
    %v986 = vadd.f32 %v965, %v984
    %v987 = vadd.f32 %v967, %v984
    %988 = vmatprep.subr.mxu0 0.0
    %989 = vmatpush1.xpose.msra.mxu0 %v442
    %990 = vmatprep.subr.mxu0 0.0
    %991 = vmatpush1.xpose.msra.mxu0 %v443
    %992 = vmatprep.subr.mxu0 0.0
    %993 = vmatpush1.xpose.msra.mxu0 0.0
    %994 = vmatprep.subr.mxu0 0.0
    %995 = vmatpush1.xpose.msra.mxu0 0.0
    %996 = vmatprep.subr.mxu0 0.0
    %997 = vmatpush1.xpose.msra.mxu0 0.0
    %998 = vmatprep.subr.mxu0 0.0
    %999 = vmatpush1.xpose.msra.mxu0 0.0
    %1000 = vmatprep.subr.mxu0 0.0
    %1001 = vmatpush1.xpose.msra.mxu0 0.0
    %1002 = vmatprep.subr.mxu0 0.0
    %1003 = vmatpush1.xpose.msra.mxu0 0.0
    %1004 = vmatprep.subr.mxu0 0.0
    %1005 = vmatpush1.xpose.msra.mxu0 0.0
    %1006 = vmatprep.subr.mxu0 0.0
    %1007 = vmatpush1.xpose.msra.mxu0 0.0
    %1008 = vmatprep.subr.mxu0 0.0
    %1009 = vmatpush1.xpose.msra.mxu0 0.0
    %1010 = vmatprep.subr.mxu0 0.0
    %1011 = vmatpush1.xpose.msra.mxu0 0.0
    %1012 = vmatprep.subr.mxu0 0.0
    %1013 = vmatpush1.xpose.msra.mxu0 0.0
    %1014 = vmatprep.subr.mxu0 0.0
    %1015 = vmatpush1.xpose.msra.mxu0 0.0
    %1016 = vmatprep.subr.mxu0 0.0
    %1017 = vmatpush1.xpose.msra.mxu0 0.0
    %1018 = vmatprep.subr.mxu0 0.0
    %1019 = vmatpush1.xpose.msra.mxu0 0.0
    %1020 = vmatprep.subr.mxu0 0.0
    %1021 = vmatpush1.xpose.msra.mxu0 0.0
    %1022 = vmatprep.subr.mxu0 0.0
    %1023 = vmatpush1.xpose.msra.mxu0 0.0
    %1024 = vmatprep.subr.mxu0 0.0
    %1025 = vmatpush1.xpose.msra.mxu0 0.0
    %1026 = vmatprep.subr.mxu0 0.0
    %1027 = vmatpush1.xpose.msra.mxu0 0.0
    %1028 = vmatprep.subr.mxu0 0.0
    %1029 = vmatpush1.xpose.msra.mxu0 0.0
    %1030 = vmatprep.subr.mxu0 0.0
    %1031 = vmatpush1.xpose.msra.mxu0 0.0
    %1032 = vmatprep.subr.mxu0 0.0
    %1033 = vmatpush1.xpose.msra.mxu0 0.0
    %1034 = vmatprep.subr.mxu0 0.0
    %1035 = vmatpush1.xpose.msra.mxu0 0.0
    %1036 = vmatprep.subr.mxu0 0.0
    %1037 = vmatpush1.xpose.msra.mxu0 0.0
    %1038 = vmatprep.subr.mxu0 0.0
    %1039 = vmatpush1.xpose.msra.mxu0 0.0
    %1040 = vmatprep.subr.mxu0 0.0
    %1041 = vmatpush1.xpose.msra.mxu0 0.0
    %1042 = vmatprep.subr.mxu0 0.0
    %1043 = vmatpush1.xpose.msra.mxu0 0.0
    %1044 = vmatprep.subr.mxu0 0.0
    %1045 = vmatpush1.xpose.msra.mxu0 0.0
    %1046 = vmatprep.subr.mxu0 0.0
    %1047 = vmatpush1.xpose.msra.mxu0 0.0
    %1048 = vmatprep.subr.mxu0 0.0
    %1049 = vmatpush1.xpose.msra.mxu0 0.0
    %1050 = vmatprep.subr.mxu0 0.0
    %1051 = vmatpush1.xpose.msra.mxu0 0.0
    %1052 = vmatprep.mubr.f32.mxu0 0.0
    %1053 = vmatmul.mubr.f32.gmra.mrb[0].mxu0 %v442
    %v1054 = vpop.f32.mrb[0].mxu0
    %v1055 = vadd.f32 0.0, %v1054
    %v1056 = vpop.f32.mrb[0].mxu0
    %1057 = vmatprep.mubr.f32.mxu0 0.0
    %1058 = vmatmul.mubr.f32.gmra.mrb[0].mxu0 %v443
    %v1059 = vpop.f32.mrb[0].mxu0
    %v1060 = vadd.f32 0.0, %v1059
    %v1061 = vpop.f32.mrb[0].mxu0
    %1062 = vdwg.mxu0
    %v1063 = vmul.f32 %v1055, 2.0
    %v1064 = vmul.f32 %v1060, 2.0
    %v1065 = vsub.f32 %v986, %v1063
    %v1066 = vsub.f32 %v987, %v1064
    %v1067 = vmax.f32 %v1065, 0.0
    %v1068 = vmax.f32 %v1066, 0.0
    %v1069 = vsub.f32 0.0, %v1067
    %v1070 = vsub.f32 0.0, %v1068
    %v1071 = vmul.f32 %v1069, 0.01
    %v1072 = vmul.f32 %v1070, 0.01
    %v1073 = vmul.f32 %v1071, 1.442695
    %v1074 = vpow.pop %v1073
    %v1075 = vmul.f32 %v1072, 1.442695
    %v1076 = vpow.pop %v1075
    %v1077 = vld [vmem:[#allocation7] sm:$0xff]
    %v1078 = vld [vmem:[#allocation7 + $0x8] sm:$0xff]
    %v1079 = vmul.f32 %v1077, %v1077
    %v1080 = vmul.f32 %v1078, %v1078
    %1081 = vadd.xlane.f32.xlu0 %v1079
    %v1082 = vpop.xlane.xlu0 %1081
    %1083 = vadd.xlane.f32.xlu0 %v1080
    %v1084 = vpop.xlane.xlu0 %1083
    %v1087 = vlaneseq
    %v1088 = vshrl.u32 %v1087, 7
    %v1089 = vsub.s32 %v727, %v1088
    %v1090 = vrot.slane %v1082, %v1089
    %v1091 = vlaneseq
    %v1092 = vshrl.u32 %v1091, 7
    %v1093 = vsub.s32 %v732, %v1092
    %v1094 = vrot.slane %v1084, %v1093
    %v1095 = vsel %vm737, %v1094, %v1090
    %v1096 = vsel %vm739, %v1095, %v1095
    %v1097 = vsel %vm741, %v1095, %v1096
    %v1098 = vsel %vm743, %v1095, %v1097
    %v1099 = vsel %vm745, %v1095, %v1098
    %v1100 = vsel %vm747, %v1095, %v1099
    %v1101 = vsel %vm749, %v1095, %v1100
    %v1103 = vadd.f32 %v1082, %v1101
    %v1104 = vadd.f32 %v1084, %v1101
    %1105 = vmatprep.subr.mxu0 0.0
    %1106 = vmatpush1.xpose.msra.mxu0 %v1077
    %1107 = vmatprep.subr.mxu0 0.0
    %1108 = vmatpush1.xpose.msra.mxu0 %v1078
    %1109 = vmatprep.subr.mxu0 0.0
    %1110 = vmatpush1.xpose.msra.mxu0 0.0
    %1111 = vmatprep.subr.mxu0 0.0
    %1112 = vmatpush1.xpose.msra.mxu0 0.0
    %1113 = vmatprep.subr.mxu0 0.0
    %1114 = vmatpush1.xpose.msra.mxu0 0.0
    %1115 = vmatprep.subr.mxu0 0.0
    %1116 = vmatpush1.xpose.msra.mxu0 0.0
    %1117 = vmatprep.subr.mxu0 0.0
    %1118 = vmatpush1.xpose.msra.mxu0 0.0
    %1119 = vmatprep.subr.mxu0 0.0
    %1120 = vmatpush1.xpose.msra.mxu0 0.0
    %1121 = vmatprep.subr.mxu0 0.0
    %1122 = vmatpush1.xpose.msra.mxu0 0.0
    %1123 = vmatprep.subr.mxu0 0.0
    %1124 = vmatpush1.xpose.msra.mxu0 0.0
    %1125 = vmatprep.subr.mxu0 0.0
    %1126 = vmatpush1.xpose.msra.mxu0 0.0
    %1127 = vmatprep.subr.mxu0 0.0
    %1128 = vmatpush1.xpose.msra.mxu0 0.0
    %1129 = vmatprep.subr.mxu0 0.0
    %1130 = vmatpush1.xpose.msra.mxu0 0.0
    %1131 = vmatprep.subr.mxu0 0.0
    %1132 = vmatpush1.xpose.msra.mxu0 0.0
    %1133 = vmatprep.subr.mxu0 0.0
    %1134 = vmatpush1.xpose.msra.mxu0 0.0
    %1135 = vmatprep.subr.mxu0 0.0
    %1136 = vmatpush1.xpose.msra.mxu0 0.0
    %1137 = vmatprep.subr.mxu0 0.0
    %1138 = vmatpush1.xpose.msra.mxu0 0.0
    %1139 = vmatprep.subr.mxu0 0.0
    %1140 = vmatpush1.xpose.msra.mxu0 0.0
    %1141 = vmatprep.subr.mxu0 0.0
    %1142 = vmatpush1.xpose.msra.mxu0 0.0
    %1143 = vmatprep.subr.mxu0 0.0
    %1144 = vmatpush1.xpose.msra.mxu0 0.0
    %1145 = vmatprep.subr.mxu0 0.0
    %1146 = vmatpush1.xpose.msra.mxu0 0.0
    %1147 = vmatprep.subr.mxu0 0.0
    %1148 = vmatpush1.xpose.msra.mxu0 0.0
    %1149 = vmatprep.subr.mxu0 0.0
    %1150 = vmatpush1.xpose.msra.mxu0 0.0
    %1151 = vmatprep.subr.mxu0 0.0
    %1152 = vmatpush1.xpose.msra.mxu0 0.0
    %1153 = vmatprep.subr.mxu0 0.0
    %1154 = vmatpush1.xpose.msra.mxu0 0.0
    %1155 = vmatprep.subr.mxu0 0.0
    %1156 = vmatpush1.xpose.msra.mxu0 0.0
    %1157 = vmatprep.subr.mxu0 0.0
    %1158 = vmatpush1.xpose.msra.mxu0 0.0
    %1159 = vmatprep.subr.mxu0 0.0
    %1160 = vmatpush1.xpose.msra.mxu0 0.0
    %1161 = vmatprep.subr.mxu0 0.0
    %1162 = vmatpush1.xpose.msra.mxu0 0.0
    %1163 = vmatprep.subr.mxu0 0.0
    %1164 = vmatpush1.xpose.msra.mxu0 0.0
    %1165 = vmatprep.subr.mxu0 0.0
    %1166 = vmatpush1.xpose.msra.mxu0 0.0
    %1167 = vmatprep.subr.mxu0 0.0
    %1168 = vmatpush1.xpose.msra.mxu0 0.0
    %1169 = vmatprep.mubr.f32.mxu0 0.0
    %1170 = vmatmul.mubr.f32.gmra.mrb[0].mxu0 %v1077
    %v1171 = vpop.f32.mrb[0].mxu0
    %v1172 = vadd.f32 0.0, %v1171
    %v1173 = vpop.f32.mrb[0].mxu0
    %1174 = vmatprep.mubr.f32.mxu0 0.0
    %1175 = vmatmul.mubr.f32.gmra.mrb[0].mxu0 %v1078
    %v1176 = vpop.f32.mrb[0].mxu0
    %v1177 = vadd.f32 0.0, %v1176
    %v1178 = vpop.f32.mrb[0].mxu0
    %1179 = vdwg.mxu0
    %v1180 = vmul.f32 %v1172, 2.0
    %v1181 = vmul.f32 %v1177, 2.0
    %v1182 = vsub.f32 %v1103, %v1180
    %v1183 = vsub.f32 %v1104, %v1181
    %v1184 = vmax.f32 %v1182, 0.0
    %v1185 = vmax.f32 %v1183, 0.0
    %v1186 = vsub.f32 0.0, %v1184
    %v1187 = vsub.f32 0.0, %v1185
    %v1188 = vmul.f32 %v1186, 0.01
    %v1189 = vmul.f32 %v1187, 0.01
    %v1190 = vmul.f32 %v1188, 1.442695
    %v1191 = vpow.pop %v1190
    %v1192 = vmul.f32 %v1189, 1.442695
    %v1193 = vpow.pop %v1192
    %v1194 = vmul.f32 %v167, %v167
    %v1195 = vmul.f32 %v168, %v168
    %v1196 = vmul.f32 %v169, %v169
    %v1197 = vmul.f32 %v170, %v170
    %v1198 = vadd.f32 %v1194, %v1195
    %1199 = vadd.xlane.f32.xlu0 %v1198
    %v1200 = vpop.xlane.xlu0 %1199
    %v1201 = vadd.f32 %v1196, %v1197
    %1202 = vadd.xlane.f32.xlu0 %v1201
    %v1203 = vpop.xlane.xlu0 %1202
    %v1206 = vlaneseq
    %v1207 = vshrl.u32 %v1206, 7
    %v1208 = vsub.s32 %v727, %v1207
    %v1209 = vrot.slane %v1200, %v1208
    %v1210 = vlaneseq
    %v1211 = vshrl.u32 %v1210, 7
    %v1212 = vsub.s32 %v732, %v1211
    %v1213 = vrot.slane %v1203, %v1212
    %v1214 = vsel %vm737, %v1213, %v1209
    %v1215 = vsel %vm739, %v1214, %v1214
    %v1216 = vsel %vm741, %v1214, %v1215
    %v1217 = vsel %vm743, %v1214, %v1216
    %v1218 = vsel %vm745, %v1214, %v1217
    %v1219 = vsel %vm747, %v1214, %v1218
    %v1220 = vsel %vm749, %v1214, %v1219
    %v1222 = vadd.f32 %v1200, %v1220
    %v1223 = vadd.f32 %v1203, %v1220
    %1224 = vmatprep.subr.mxu0 %v168
    %1225 = vmatpush1.xpose.msra.mxu0 %v167
    %1226 = vmatprep.subr.mxu0 %v170
    %1227 = vmatpush1.xpose.msra.mxu0 %v169
    %1228 = vmatprep.subr.mxu0 0.0
    %1229 = vmatpush1.xpose.msra.mxu0 0.0
    %1230 = vmatprep.subr.mxu0 0.0
    %1231 = vmatpush1.xpose.msra.mxu0 0.0
    %1232 = vmatprep.subr.mxu0 0.0
    %1233 = vmatpush1.xpose.msra.mxu0 0.0
    %1234 = vmatprep.subr.mxu0 0.0
    %1235 = vmatpush1.xpose.msra.mxu0 0.0
    %1236 = vmatprep.subr.mxu0 0.0
    %1237 = vmatpush1.xpose.msra.mxu0 0.0
    %1238 = vmatprep.subr.mxu0 0.0
    %1239 = vmatpush1.xpose.msra.mxu0 0.0
    %1240 = vmatprep.subr.mxu0 0.0
    %1241 = vmatpush1.xpose.msra.mxu0 0.0
    %1242 = vmatprep.subr.mxu0 0.0
    %1243 = vmatpush1.xpose.msra.mxu0 0.0
    %1244 = vmatprep.subr.mxu0 0.0
    %1245 = vmatpush1.xpose.msra.mxu0 0.0
    %1246 = vmatprep.subr.mxu0 0.0
    %1247 = vmatpush1.xpose.msra.mxu0 0.0
    %1248 = vmatprep.subr.mxu0 0.0
    %1249 = vmatpush1.xpose.msra.mxu0 0.0
    %1250 = vmatprep.subr.mxu0 0.0
    %1251 = vmatpush1.xpose.msra.mxu0 0.0
    %1252 = vmatprep.subr.mxu0 0.0
    %1253 = vmatpush1.xpose.msra.mxu0 0.0
    %1254 = vmatprep.subr.mxu0 0.0
    %1255 = vmatpush1.xpose.msra.mxu0 0.0
    %1256 = vmatprep.subr.mxu0 0.0
    %1257 = vmatpush1.xpose.msra.mxu0 0.0
    %1258 = vmatprep.subr.mxu0 0.0
    %1259 = vmatpush1.xpose.msra.mxu0 0.0
    %1260 = vmatprep.subr.mxu0 0.0
    %1261 = vmatpush1.xpose.msra.mxu0 0.0
    %1262 = vmatprep.subr.mxu0 0.0
    %1263 = vmatpush1.xpose.msra.mxu0 0.0
    %1264 = vmatprep.subr.mxu0 0.0
    %1265 = vmatpush1.xpose.msra.mxu0 0.0
    %1266 = vmatprep.subr.mxu0 0.0
    %1267 = vmatpush1.xpose.msra.mxu0 0.0
    %1268 = vmatprep.subr.mxu0 0.0
    %1269 = vmatpush1.xpose.msra.mxu0 0.0
    %1270 = vmatprep.subr.mxu0 0.0
    %1271 = vmatpush1.xpose.msra.mxu0 0.0
    %1272 = vmatprep.subr.mxu0 0.0
    %1273 = vmatpush1.xpose.msra.mxu0 0.0
    %1274 = vmatprep.subr.mxu0 0.0
    %1275 = vmatpush1.xpose.msra.mxu0 0.0
    %1276 = vmatprep.subr.mxu0 0.0
    %1277 = vmatpush1.xpose.msra.mxu0 0.0
    %1278 = vmatprep.subr.mxu0 0.0
    %1279 = vmatpush1.xpose.msra.mxu0 0.0
    %1280 = vmatprep.subr.mxu0 0.0
    %1281 = vmatpush1.xpose.msra.mxu0 0.0
    %1282 = vmatprep.subr.mxu0 0.0
    %1283 = vmatpush1.xpose.msra.mxu0 0.0
    %1284 = vmatprep.subr.mxu0 0.0
    %1285 = vmatpush1.xpose.msra.mxu0 0.0
    %1286 = vmatprep.subr.mxu0 0.0
    %1287 = vmatpush1.xpose.msra.mxu0 0.0
    %1288 = vmatprep.mubr.f32.mxu0 %v168
    %1289 = vmatmul.mubr.f32.gmra.mrb[0].mxu0 %v167
    %v1290 = vpop.f32.mrb[0].mxu0
    %v1291 = vadd.f32 0.0, %v1290
    %v1292 = vpop.f32.mrb[0].mxu0
    %1293 = vmatprep.mubr.f32.mxu0 %v170
    %1294 = vmatmul.mubr.f32.gmra.mrb[0].mxu0 %v169
    %v1295 = vpop.f32.mrb[0].mxu0
    %v1296 = vadd.f32 0.0, %v1295
    %v1297 = vpop.f32.mrb[0].mxu0
    %1298 = vdwg.mxu0
    %v1299 = vmul.f32 %v1291, 2.0
    %v1300 = vmul.f32 %v1296, 2.0
    %v1301 = vsub.f32 %v1222, %v1299
    %v1302 = vsub.f32 %v1223, %v1300
    %v1303 = vmax.f32 %v1301, 0.0
    %v1304 = vmax.f32 %v1302, 0.0
    %v1305 = vsub.f32 0.0, %v1303
    %v1306 = vsub.f32 0.0, %v1304
    %v1307 = vmul.f32 %v1305, 0.01
    %v1308 = vmul.f32 %v1306, 0.01
    %v1309 = vmul.f32 %v1307, 1.442695
    %v1310 = vpow.pop %v1309
    %v1311 = vmul.f32 %v1308, 1.442695
    %v1312 = vpow.pop %v1311
    %v1313 = vmul.f32 %v714, %v714
    %v1314 = vmul.f32 %v715, %v715
    %1315 = vadd.xlane.f32.xlu0 %v1313
    %v1316 = vpop.xlane.xlu0 %1315
    %1317 = vadd.xlane.f32.xlu0 %v1314
    %v1318 = vpop.xlane.xlu0 %1317
    %v1321 = vlaneseq
    %v1322 = vshrl.u32 %v1321, 7
    %v1323 = vsub.s32 %v727, %v1322
    %v1324 = vrot.slane %v1316, %v1323
    %v1325 = vlaneseq
    %v1326 = vshrl.u32 %v1325, 7
    %v1327 = vsub.s32 %v732, %v1326
    %v1328 = vrot.slane %v1318, %v1327
    %v1329 = vsel %vm737, %v1328, %v1324
    %v1330 = vsel %vm739, %v1329, %v1329
    %v1331 = vsel %vm741, %v1329, %v1330
    %v1332 = vsel %vm743, %v1329, %v1331
    %v1333 = vsel %vm745, %v1329, %v1332
    %v1334 = vsel %vm747, %v1329, %v1333
    %v1335 = vsel %vm749, %v1329, %v1334
    %v1337 = vadd.f32 %v1316, %v1335
    %v1338 = vadd.f32 %v1318, %v1335
    %1339 = vmatprep.subr.mxu0 0.0
    %1340 = vmatpush1.xpose.msra.mxu0 %v714
    %1341 = vmatprep.subr.mxu0 0.0
    %1342 = vmatpush1.xpose.msra.mxu0 %v715
    %1343 = vmatprep.subr.mxu0 0.0
    %1344 = vmatpush1.xpose.msra.mxu0 0.0
    %1345 = vmatprep.subr.mxu0 0.0
    %1346 = vmatpush1.xpose.msra.mxu0 0.0
    %1347 = vmatprep.subr.mxu0 0.0
    %1348 = vmatpush1.xpose.msra.mxu0 0.0
    %1349 = vmatprep.subr.mxu0 0.0
    %1350 = vmatpush1.xpose.msra.mxu0 0.0
    %1351 = vmatprep.subr.mxu0 0.0
    %1352 = vmatpush1.xpose.msra.mxu0 0.0
    %1353 = vmatprep.subr.mxu0 0.0
    %1354 = vmatpush1.xpose.msra.mxu0 0.0
    %1355 = vmatprep.subr.mxu0 0.0
    %1356 = vmatpush1.xpose.msra.mxu0 0.0
    %1357 = vmatprep.subr.mxu0 0.0
    %1358 = vmatpush1.xpose.msra.mxu0 0.0
    %1359 = vmatprep.subr.mxu0 0.0
    %1360 = vmatpush1.xpose.msra.mxu0 0.0
    %1361 = vmatprep.subr.mxu0 0.0
    %1362 = vmatpush1.xpose.msra.mxu0 0.0
    %1363 = vmatprep.subr.mxu0 0.0
    %1364 = vmatpush1.xpose.msra.mxu0 0.0
    %1365 = vmatprep.subr.mxu0 0.0
    %1366 = vmatpush1.xpose.msra.mxu0 0.0
    %1367 = vmatprep.subr.mxu0 0.0
    %1368 = vmatpush1.xpose.msra.mxu0 0.0
    %1369 = vmatprep.subr.mxu0 0.0
    %1370 = vmatpush1.xpose.msra.mxu0 0.0
    %1371 = vmatprep.subr.mxu0 0.0
    %1372 = vmatpush1.xpose.msra.mxu0 0.0
    %1373 = vmatprep.subr.mxu0 0.0
    %1374 = vmatpush1.xpose.msra.mxu0 0.0
    %1375 = vmatprep.subr.mxu0 0.0
    %1376 = vmatpush1.xpose.msra.mxu0 0.0
    %1377 = vmatprep.subr.mxu0 0.0
    %1378 = vmatpush1.xpose.msra.mxu0 0.0
    %1379 = vmatprep.subr.mxu0 0.0
    %1380 = vmatpush1.xpose.msra.mxu0 0.0
    %1381 = vmatprep.subr.mxu0 0.0
    %1382 = vmatpush1.xpose.msra.mxu0 0.0
    %1383 = vmatprep.subr.mxu0 0.0
    %1384 = vmatpush1.xpose.msra.mxu0 0.0
    %1385 = vmatprep.subr.mxu0 0.0
    %1386 = vmatpush1.xpose.msra.mxu0 0.0
    %1387 = vmatprep.subr.mxu0 0.0
    %1388 = vmatpush1.xpose.msra.mxu0 0.0
    %1389 = vmatprep.subr.mxu0 0.0
    %1390 = vmatpush1.xpose.msra.mxu0 0.0
    %1391 = vmatprep.subr.mxu0 0.0
    %1392 = vmatpush1.xpose.msra.mxu0 0.0
    %1393 = vmatprep.subr.mxu0 0.0
    %1394 = vmatpush1.xpose.msra.mxu0 0.0
    %1395 = vmatprep.subr.mxu0 0.0
    %1396 = vmatpush1.xpose.msra.mxu0 0.0
    %1397 = vmatprep.subr.mxu0 0.0
    %1398 = vmatpush1.xpose.msra.mxu0 0.0
    %1399 = vmatprep.subr.mxu0 0.0
    %1400 = vmatpush1.xpose.msra.mxu0 0.0
    %1401 = vmatprep.subr.mxu0 0.0
    %1402 = vmatpush1.xpose.msra.mxu0 0.0
    %1403 = vmatprep.mubr.f32.mxu0 0.0
    %1404 = vmatmul.mubr.f32.gmra.mrb[0].mxu0 %v714
    %v1405 = vpop.f32.mrb[0].mxu0
    %v1406 = vadd.f32 0.0, %v1405
    %v1407 = vpop.f32.mrb[0].mxu0
    %1408 = vmatprep.mubr.f32.mxu0 0.0
    %1409 = vmatmul.mubr.f32.gmra.mrb[0].mxu0 %v715
    %v1410 = vpop.f32.mrb[0].mxu0
    %v1411 = vadd.f32 0.0, %v1410
    %v1412 = vpop.f32.mrb[0].mxu0
    %1413 = vdwg.mxu0
    %v1414 = vmul.f32 %v1406, 2.0
    %v1415 = vmul.f32 %v1411, 2.0
    %v1416 = vsub.f32 %v1337, %v1414
    %v1417 = vsub.f32 %v1338, %v1415
    %v1418 = vmax.f32 %v1416, 0.0
    %v1419 = vmax.f32 %v1417, 0.0
    %v1420 = vsub.f32 0.0, %v1418
    %v1421 = vsub.f32 0.0, %v1419
    %v1422 = vmul.f32 %v1420, 0.01
    %v1423 = vmul.f32 %v1421, 0.01
    %v1424 = vmul.f32 %v1422, 1.442695
    %v1425 = vpow.pop %v1424
    %v1426 = vmul.f32 %v1423, 1.442695
    %v1427 = vpow.pop %v1426
    %vm1428 = vcmask 130048
    %v1429 = vsel %vm1428, %v840, 0.0
    %1430 = vadd.xlane.f32.xlu0 %v1429
    %v1431 = vpop.xlane.xlu0 %1430
    %v1432 = vsel %vm1428, %v842, 0.0
    %1433 = vadd.xlane.f32.xlu0 %v1432
    %v1434 = vpop.xlane.xlu0 %1433
    %v1435 = vrcp.pop 16.0
    %v1436 = vmul.f32 %v1431, %v1435
    %v1437 = vmul.f32 %v1434, %v1435
    %v1438 = vadd.f32 %v1429, %v1432
    %v1439 = vrot.slane %v1438, 4
    %v1440 = vadd.f32 %v1438, %v1439
    %v1441 = vrot.slane %v1440, 2
    %v1442 = vadd.f32 %v1440, %v1441
    %v1443 = vrot.slane %v1442, 1
    %v1444 = vadd.f32 %v1442, %v1443
    %v1445 = vmul.f32 %v1444, %v1435
    %v1446 = vsel %vm1428, %v1445, 0.0
    %1447 = vadd.xlane.f32.xlu0 %v1446
    %v1448 = vpop.xlane.xlu0 %1447
    %v1449 = vmul.f32 %v1448, %v1435
    %v1450 = vsub.f32 %v840, %v1436
    %v1451 = vsub.f32 %v842, %v1437
    %v1452 = vsub.f32 %v1450, %v1445
    %v1453 = vsub.f32 %v1451, %v1445
    %v1454 = vadd.f32 %v1452, %v1449
    %v1455 = vadd.f32 %v1453, %v1449
    %v1456 = vsel %vm1428, %v959, 0.0
    %1457 = vadd.xlane.f32.xlu0 %v1456
    %v1458 = vpop.xlane.xlu0 %1457
    %v1459 = vsel %vm1428, %v961, 0.0
    %1460 = vadd.xlane.f32.xlu0 %v1459
    %v1461 = vpop.xlane.xlu0 %1460
    %v1462 = vmul.f32 %v1458, %v1435
    %v1463 = vmul.f32 %v1461, %v1435
    %v1464 = vadd.f32 %v1456, %v1459
    %v1465 = vrot.slane %v1464, 4
    %v1466 = vadd.f32 %v1464, %v1465
    %v1467 = vrot.slane %v1466, 2
    %v1468 = vadd.f32 %v1466, %v1467
    %v1469 = vrot.slane %v1468, 1
    %v1470 = vadd.f32 %v1468, %v1469
    %v1471 = vmul.f32 %v1470, %v1435
    %v1472 = vsel %vm1428, %v1471, 0.0
    %1473 = vadd.xlane.f32.xlu0 %v1472
    %v1474 = vpop.xlane.xlu0 %1473
    %v1475 = vmul.f32 %v1474, %v1435
    %v1476 = vsub.f32 %v959, %v1462
    %v1477 = vsub.f32 %v961, %v1463
    %v1478 = vsub.f32 %v1476, %v1471
    %v1479 = vsub.f32 %v1477, %v1471
    %v1480 = vadd.f32 %v1478, %v1475
    %v1481 = vadd.f32 %v1479, %v1475
    %v1482 = vsel %vm1428, %v1074, 0.0
    %1483 = vadd.xlane.f32.xlu0 %v1482
    %v1484 = vpop.xlane.xlu0 %1483
    %v1485 = vsel %vm1428, %v1076, 0.0
    %1486 = vadd.xlane.f32.xlu0 %v1485
    %v1487 = vpop.xlane.xlu0 %1486
    %v1488 = vmul.f32 %v1484, %v1435
    %v1489 = vmul.f32 %v1487, %v1435
    %v1490 = vadd.f32 %v1482, %v1485
    %v1491 = vrot.slane %v1490, 4
    %v1492 = vadd.f32 %v1490, %v1491
    %v1493 = vrot.slane %v1492, 2
    %v1494 = vadd.f32 %v1492, %v1493
    %v1495 = vrot.slane %v1494, 1
    %v1496 = vadd.f32 %v1494, %v1495
    %v1497 = vmul.f32 %v1496, %v1435
    %v1498 = vsel %vm1428, %v1497, 0.0
    %1499 = vadd.xlane.f32.xlu0 %v1498
    %v1500 = vpop.xlane.xlu0 %1499
    %v1501 = vmul.f32 %v1500, %v1435
    %v1502 = vsub.f32 %v1074, %v1488
    %v1503 = vsub.f32 %v1076, %v1489
    %v1504 = vsub.f32 %v1502, %v1497
    %v1505 = vsub.f32 %v1503, %v1497
    %v1506 = vadd.f32 %v1504, %v1501
    %v1507 = vadd.f32 %v1505, %v1501
    %v1508 = vsel %vm1428, %v1191, 0.0
    %1509 = vadd.xlane.f32.xlu0 %v1508
    %v1510 = vpop.xlane.xlu0 %1509
    %v1511 = vsel %vm1428, %v1193, 0.0
    %1512 = vadd.xlane.f32.xlu0 %v1511
    %v1513 = vpop.xlane.xlu0 %1512
    %v1514 = vmul.f32 %v1510, %v1435
    %v1515 = vmul.f32 %v1513, %v1435
    %v1516 = vadd.f32 %v1508, %v1511
    %v1517 = vrot.slane %v1516, 4
    %v1518 = vadd.f32 %v1516, %v1517
    %v1519 = vrot.slane %v1518, 2
    %v1520 = vadd.f32 %v1518, %v1519
    %v1521 = vrot.slane %v1520, 1
    %v1522 = vadd.f32 %v1520, %v1521
    %v1523 = vmul.f32 %v1522, %v1435
    %v1524 = vsel %vm1428, %v1523, 0.0
    %1525 = vadd.xlane.f32.xlu0 %v1524
    %v1526 = vpop.xlane.xlu0 %1525
    %v1527 = vmul.f32 %v1526, %v1435
    %v1528 = vsub.f32 %v1191, %v1514
    %v1529 = vsub.f32 %v1193, %v1515
    %v1530 = vsub.f32 %v1528, %v1523
    %v1531 = vsub.f32 %v1529, %v1523
    %v1532 = vadd.f32 %v1530, %v1527
    %v1533 = vadd.f32 %v1531, %v1527
    %v1534 = vsel %vm1428, %v1310, 0.0
    %1535 = vadd.xlane.f32.xlu0 %v1534
    %v1536 = vpop.xlane.xlu0 %1535
    %v1537 = vsel %vm1428, %v1312, 0.0
    %1538 = vadd.xlane.f32.xlu0 %v1537
    %v1539 = vpop.xlane.xlu0 %1538
    %v1540 = vmul.f32 %v1536, %v1435
    %v1541 = vmul.f32 %v1539, %v1435
    %v1542 = vadd.f32 %v1534, %v1537
    %v1543 = vrot.slane %v1542, 4
    %v1544 = vadd.f32 %v1542, %v1543
    %v1545 = vrot.slane %v1544, 2
    %v1546 = vadd.f32 %v1544, %v1545
    %v1547 = vrot.slane %v1546, 1
    %v1548 = vadd.f32 %v1546, %v1547
    %v1549 = vmul.f32 %v1548, %v1435
    %v1550 = vsel %vm1428, %v1549, 0.0
    %1551 = vadd.xlane.f32.xlu0 %v1550
    %v1552 = vpop.xlane.xlu0 %1551
    %v1553 = vmul.f32 %v1552, %v1435
    %v1554 = vsub.f32 %v1310, %v1540
    %v1555 = vsub.f32 %v1312, %v1541
    %v1556 = vsub.f32 %v1554, %v1549
    %v1557 = vsub.f32 %v1555, %v1549
    %v1558 = vadd.f32 %v1556, %v1553
    %v1559 = vadd.f32 %v1557, %v1553
    %v1560 = vmul.f32 %v1454, %v959
    %v1561 = vmul.f32 %v1455, %v961
    %v1562 = vsel %vm1428, %v1560, 0.0
    %1563 = vadd.xlane.f32.xlu0 %v1562
    %v1564 = vpop.xlane.xlu0 %1563
    %v1565 = vsel %vm1428, %v1561, 0.0
    %1566 = vadd.xlane.f32.xlu0 %v1565
    %v1567 = vpop.xlane.xlu0 %1566
    %v1568 = vadd.f32 %v1564, %v1567
    %v1569 = vrot.slane %v1568, 4
    %v1570 = vadd.f32 %v1568, %v1569
    %v1571 = vrot.slane %v1570, 2
    %v1572 = vadd.f32 %v1570, %v1571
    %v1573 = vrot.slane %v1572, 1
    %v1574 = vadd.f32 %v1572, %v1573
    %v1575 = vmul.f32 %v1574, 0.0044444446
    %v1576 = vmul.f32 %v1454, %v840
    %v1577 = vmul.f32 %v1455, %v842
    %v1578 = vsel %vm1428, %v1576, 0.0
    %1579 = vadd.xlane.f32.xlu0 %v1578
    %v1580 = vpop.xlane.xlu0 %1579
    %v1581 = vsel %vm1428, %v1577, 0.0
    %1582 = vadd.xlane.f32.xlu0 %v1581
    %v1583 = vpop.xlane.xlu0 %1582
    %v1584 = vadd.f32 %v1580, %v1583
    %v1585 = vrot.slane %v1584, 4
    %v1586 = vadd.f32 %v1584, %v1585
    %v1587 = vrot.slane %v1586, 2
    %v1588 = vadd.f32 %v1586, %v1587
    %v1589 = vrot.slane %v1588, 1
    %v1590 = vadd.f32 %v1588, %v1589
    %v1591 = vmul.f32 %v1590, 0.0044444446
    %v1592 = vmul.f32 %v1480, %v959
    %v1593 = vmul.f32 %v1481, %v961
    %v1594 = vsel %vm1428, %v1592, 0.0
    %1595 = vadd.xlane.f32.xlu0 %v1594
    %v1596 = vpop.xlane.xlu0 %1595
    %v1597 = vsel %vm1428, %v1593, 0.0
    %1598 = vadd.xlane.f32.xlu0 %v1597
    %v1599 = vpop.xlane.xlu0 %1598
    %v1600 = vadd.f32 %v1596, %v1599
    %v1601 = vrot.slane %v1600, 4
    %v1602 = vadd.f32 %v1600, %v1601
    %v1603 = vrot.slane %v1602, 2
    %v1604 = vadd.f32 %v1602, %v1603
    %v1605 = vrot.slane %v1604, 1
    %v1606 = vadd.f32 %v1604, %v1605
    %v1607 = vmul.f32 %v1606, 0.0044444446
    %v1608 = vmul.f32 %v1506, %v959
    %v1609 = vmul.f32 %v1507, %v961
    %v1610 = vsel %vm1428, %v1608, 0.0
    %1611 = vadd.xlane.f32.xlu0 %v1610
    %v1612 = vpop.xlane.xlu0 %1611
    %v1613 = vsel %vm1428, %v1609, 0.0
    %1614 = vadd.xlane.f32.xlu0 %v1613
    %v1615 = vpop.xlane.xlu0 %1614
    %v1616 = vadd.f32 %v1612, %v1615
    %v1617 = vrot.slane %v1616, 4
    %v1618 = vadd.f32 %v1616, %v1617
    %v1619 = vrot.slane %v1618, 2
    %v1620 = vadd.f32 %v1618, %v1619
    %v1621 = vrot.slane %v1620, 1
    %v1622 = vadd.f32 %v1620, %v1621
    %v1623 = vmul.f32 %v1622, 0.0044444446
    %v1624 = vmul.f32 %v1506, %v1074
    %v1625 = vmul.f32 %v1507, %v1076
    %v1626 = vsel %vm1428, %v1624, 0.0
    %1627 = vadd.xlane.f32.xlu0 %v1626
    %v1628 = vpop.xlane.xlu0 %1627
    %v1629 = vsel %vm1428, %v1625, 0.0
    %1630 = vadd.xlane.f32.xlu0 %v1629
    %v1631 = vpop.xlane.xlu0 %1630
    %v1632 = vadd.f32 %v1628, %v1631
    %v1633 = vrot.slane %v1632, 4
    %v1634 = vadd.f32 %v1632, %v1633
    %v1635 = vrot.slane %v1634, 2
    %v1636 = vadd.f32 %v1634, %v1635
    %v1637 = vrot.slane %v1636, 1
    %v1638 = vadd.f32 %v1636, %v1637
    %v1639 = vmul.f32 %v1638, 0.0044444446
    %v1640 = vmul.f32 %v1532, %v1310
    %v1641 = vmul.f32 %v1533, %v1312
    %v1642 = vsel %vm1428, %v1640, 0.0
    %1643 = vadd.xlane.f32.xlu0 %v1642
    %v1644 = vpop.xlane.xlu0 %1643
    %v1645 = vsel %vm1428, %v1641, 0.0
    %1646 = vadd.xlane.f32.xlu0 %v1645
    %v1647 = vpop.xlane.xlu0 %1646
    %v1648 = vadd.f32 %v1644, %v1647
    %v1649 = vrot.slane %v1648, 4
    %v1650 = vadd.f32 %v1648, %v1649
    %v1651 = vrot.slane %v1650, 2
    %v1652 = vadd.f32 %v1650, %v1651
    %v1653 = vrot.slane %v1652, 1
    %v1654 = vadd.f32 %v1652, %v1653
    %v1655 = vmul.f32 %v1654, 0.0044444446
    %v1656 = vmul.f32 %v1532, %v1191
    %v1657 = vmul.f32 %v1533, %v1193
    %v1658 = vsel %vm1428, %v1656, 0.0
    %1659 = vadd.xlane.f32.xlu0 %v1658
    %v1660 = vpop.xlane.xlu0 %1659
    %v1661 = vsel %vm1428, %v1657, 0.0
    %1662 = vadd.xlane.f32.xlu0 %v1661
    %v1663 = vpop.xlane.xlu0 %1662
    %v1664 = vadd.f32 %v1660, %v1663
    %v1665 = vrot.slane %v1664, 4
    %v1666 = vadd.f32 %v1664, %v1665
    %v1667 = vrot.slane %v1666, 2
    %v1668 = vadd.f32 %v1666, %v1667
    %v1669 = vrot.slane %v1668, 1
    %v1670 = vadd.f32 %v1668, %v1669
    %v1671 = vmul.f32 %v1670, 0.0044444446
    %v1672 = vmul.f32 %v1558, %v1310
    %v1673 = vmul.f32 %v1559, %v1312
    %v1674 = vsel %vm1428, %v1672, 0.0
    %1675 = vadd.xlane.f32.xlu0 %v1674
    %v1676 = vpop.xlane.xlu0 %1675
    %v1677 = vsel %vm1428, %v1673, 0.0
    %1678 = vadd.xlane.f32.xlu0 %v1677
    %v1679 = vpop.xlane.xlu0 %1678
    %v1680 = vadd.f32 %v1676, %v1679
    %v1681 = vrot.slane %v1680, 4
    %v1682 = vadd.f32 %v1680, %v1681
    %v1683 = vrot.slane %v1682, 2
    %v1684 = vadd.f32 %v1682, %v1683
    %v1685 = vrot.slane %v1684, 1
    %v1686 = vadd.f32 %v1684, %v1685
    %v1687 = vmul.f32 %v1686, 0.0044444446
    %v1688 = vmul.f32 %v1558, %v1425
    %v1689 = vmul.f32 %v1559, %v1427
    %v1690 = vsel %vm1428, %v1688, 0.0
    %1691 = vadd.xlane.f32.xlu0 %v1690
    %v1692 = vpop.xlane.xlu0 %1691
    %v1693 = vsel %vm1428, %v1689, 0.0
    %1694 = vadd.xlane.f32.xlu0 %v1693
    %v1695 = vpop.xlane.xlu0 %1694
    %v1696 = vadd.f32 %v1692, %v1695
    %v1697 = vrot.slane %v1696, 4
    %v1698 = vadd.f32 %v1696, %v1697
    %v1699 = vrot.slane %v1698, 2
    %v1700 = vadd.f32 %v1698, %v1699
    %v1701 = vrot.slane %v1700, 1
    %v1702 = vadd.f32 %v1700, %v1701
    %v1703 = vmul.f32 %v1702, 0.0044444446
    %v1704 = vadd.f32 %v1591, 1.0
    %v1705 = vadd.f32 %v1607, 1.0
    %v1706 = vmul.f32 %v1704, %v1705
    %v1707 = vrsqrt.pop %v1706
    %v1708 = vmul.f32 %v1575, %v1707
    %v1709 = vadd.f32 %v1639, 1.0
    %v1710 = vmul.f32 %v1709, %v1705
    %v1711 = vrsqrt.pop %v1710
    %v1712 = vmul.f32 %v1623, %v1711
    %v1713 = vadd.f32 %v1671, 1.0
    %v1714 = vadd.f32 %v1687, 1.0
    %v1715 = vmul.f32 %v1713, %v1714
    %v1716 = vrsqrt.pop %v1715
    %v1717 = vmul.f32 %v1655, %v1716
    %v1718 = vmul.f32 %v1712, 0.1
    %v1719 = vsub.f32 %v1708, %v1718
    %v1720 = vmul.f32 %v1703, 0.1
    %v1721 = vsub.f32 %v1717, %v1720
    %1722 = vmatprep.subr.mxu0 0.0
    %1723 = vmatpush1.xpose.msra.mxu0 %v714
    %1724 = vmatprep.subr.mxu0 0.0
    %1725 = vmatpush1.xpose.msra.mxu0 %v715
    %1726 = vmatprep.subr.mxu0 0.0
    %1727 = vmatpush1.xpose.msra.mxu0 0.0
    %1728 = vmatprep.subr.mxu0 0.0
    %1729 = vmatpush1.xpose.msra.mxu0 0.0
    %1730 = vmatprep.subr.mxu0 0.0
    %1731 = vmatpush1.xpose.msra.mxu0 0.0
    %1732 = vmatprep.subr.mxu0 0.0
    %1733 = vmatpush1.xpose.msra.mxu0 0.0
    %1734 = vmatprep.subr.mxu0 0.0
    %1735 = vmatpush1.xpose.msra.mxu0 0.0
    %1736 = vmatprep.subr.mxu0 0.0
    %1737 = vmatpush1.xpose.msra.mxu0 0.0
    %1738 = vmatprep.subr.mxu0 0.0
    %1739 = vmatpush1.xpose.msra.mxu0 0.0
    %1740 = vmatprep.subr.mxu0 0.0
    %1741 = vmatpush1.xpose.msra.mxu0 0.0
    %1742 = vmatprep.subr.mxu0 0.0
    %1743 = vmatpush1.xpose.msra.mxu0 0.0
    %1744 = vmatprep.subr.mxu0 0.0
    %1745 = vmatpush1.xpose.msra.mxu0 0.0
    %1746 = vmatprep.subr.mxu0 0.0
    %1747 = vmatpush1.xpose.msra.mxu0 0.0
    %1748 = vmatprep.subr.mxu0 0.0
    %1749 = vmatpush1.xpose.msra.mxu0 0.0
    %1750 = vmatprep.subr.mxu0 0.0
    %1751 = vmatpush1.xpose.msra.mxu0 0.0
    %1752 = vmatprep.subr.mxu0 0.0
    %1753 = vmatpush1.xpose.msra.mxu0 0.0
    %1754 = vmatprep.subr.mxu0 0.0
    %1755 = vmatpush1.xpose.msra.mxu0 0.0
    %1756 = vmatprep.subr.mxu0 0.0
    %1757 = vmatpush1.xpose.msra.mxu0 0.0
    %1758 = vmatprep.subr.mxu0 0.0
    %1759 = vmatpush1.xpose.msra.mxu0 0.0
    %1760 = vmatprep.subr.mxu0 0.0
    %1761 = vmatpush1.xpose.msra.mxu0 0.0
    %1762 = vmatprep.subr.mxu0 0.0
    %1763 = vmatpush1.xpose.msra.mxu0 0.0
    %1764 = vmatprep.subr.mxu0 0.0
    %1765 = vmatpush1.xpose.msra.mxu0 0.0
    %1766 = vmatprep.subr.mxu0 0.0
    %1767 = vmatpush1.xpose.msra.mxu0 0.0
    %1768 = vmatprep.subr.mxu0 0.0
    %1769 = vmatpush1.xpose.msra.mxu0 0.0
    %1770 = vmatprep.subr.mxu0 0.0
    %1771 = vmatpush1.xpose.msra.mxu0 0.0
    %1772 = vmatprep.subr.mxu0 0.0
    %1773 = vmatpush1.xpose.msra.mxu0 0.0
    %1774 = vmatprep.subr.mxu0 0.0
    %1775 = vmatpush1.xpose.msra.mxu0 0.0
    %1776 = vmatprep.subr.mxu0 0.0
    %1777 = vmatpush1.xpose.msra.mxu0 0.0
    %1778 = vmatprep.subr.mxu0 0.0
    %1779 = vmatpush1.xpose.msra.mxu0 0.0
    %1780 = vmatprep.subr.mxu0 0.0
    %1781 = vmatpush1.xpose.msra.mxu0 0.0
    %1782 = vmatprep.subr.mxu0 0.0
    %1783 = vmatpush1.xpose.msra.mxu0 0.0
    %1784 = vmatprep.subr.mxu0 0.0
    %1785 = vmatpush1.xpose.msra.mxu0 0.0
    %1786 = vmatprep.mubr.f32.mxu0 0.0
    %1787 = vmatmul.mubr.f32.gmra.mrb[0].mxu0 %v442
    %v1788 = vpop.f32.mrb[0].mxu0
    %v1789 = vadd.f32 0.0, %v1788
    %v1790 = vpop.f32.mrb[0].mxu0
    %1791 = vmatprep.mubr.f32.mxu0 0.0
    %1792 = vmatmul.mubr.f32.gmra.mrb[0].mxu0 %v443
    %v1793 = vpop.f32.mrb[0].mxu0
    %v1794 = vadd.f32 0.0, %v1793
    %v1795 = vpop.f32.mrb[0].mxu0
    %1796 = vdwg.mxu0
    %1797 = vmatprep.subr.mxu0 0.0
    %1798 = vmatpush1.xpose.msra.mxu0 %v714
    %1799 = vmatprep.subr.mxu0 0.0
    %1800 = vmatpush1.xpose.msra.mxu0 %v715
    %1801 = vmatprep.subr.mxu0 0.0
    %1802 = vmatpush1.xpose.msra.mxu0 0.0
    %1803 = vmatprep.subr.mxu0 0.0
    %1804 = vmatpush1.xpose.msra.mxu0 0.0
    %1805 = vmatprep.subr.mxu0 0.0
    %1806 = vmatpush1.xpose.msra.mxu0 0.0
    %1807 = vmatprep.subr.mxu0 0.0
    %1808 = vmatpush1.xpose.msra.mxu0 0.0
    %1809 = vmatprep.subr.mxu0 0.0
    %1810 = vmatpush1.xpose.msra.mxu0 0.0
    %1811 = vmatprep.subr.mxu0 0.0
    %1812 = vmatpush1.xpose.msra.mxu0 0.0
    %1813 = vmatprep.subr.mxu0 0.0
    %1814 = vmatpush1.xpose.msra.mxu0 0.0
    %1815 = vmatprep.subr.mxu0 0.0
    %1816 = vmatpush1.xpose.msra.mxu0 0.0
    %1817 = vmatprep.subr.mxu0 0.0
    %1818 = vmatpush1.xpose.msra.mxu0 0.0
    %1819 = vmatprep.subr.mxu0 0.0
    %1820 = vmatpush1.xpose.msra.mxu0 0.0
    %1821 = vmatprep.subr.mxu0 0.0
    %1822 = vmatpush1.xpose.msra.mxu0 0.0
    %1823 = vmatprep.subr.mxu0 0.0
    %1824 = vmatpush1.xpose.msra.mxu0 0.0
    %1825 = vmatprep.subr.mxu0 0.0
    %1826 = vmatpush1.xpose.msra.mxu0 0.0
    %1827 = vmatprep.subr.mxu0 0.0
    %1828 = vmatpush1.xpose.msra.mxu0 0.0
    %1829 = vmatprep.subr.mxu0 0.0
    %1830 = vmatpush1.xpose.msra.mxu0 0.0
    %1831 = vmatprep.subr.mxu0 0.0
    %1832 = vmatpush1.xpose.msra.mxu0 0.0
    %1833 = vmatprep.subr.mxu0 0.0
    %1834 = vmatpush1.xpose.msra.mxu0 0.0
    %1835 = vmatprep.subr.mxu0 0.0
    %1836 = vmatpush1.xpose.msra.mxu0 0.0
    %1837 = vmatprep.subr.mxu0 0.0
    %1838 = vmatpush1.xpose.msra.mxu0 0.0
    %1839 = vmatprep.subr.mxu0 0.0
    %1840 = vmatpush1.xpose.msra.mxu0 0.0
    %1841 = vmatprep.subr.mxu0 0.0
    %1842 = vmatpush1.xpose.msra.mxu0 0.0
    %1843 = vmatprep.subr.mxu0 0.0
    %1844 = vmatpush1.xpose.msra.mxu0 0.0
    %1845 = vmatprep.subr.mxu0 0.0
    %1846 = vmatpush1.xpose.msra.mxu0 0.0
    %1847 = vmatprep.subr.mxu0 0.0
    %1848 = vmatpush1.xpose.msra.mxu0 0.0
    %1849 = vmatprep.subr.mxu0 0.0
    %1850 = vmatpush1.xpose.msra.mxu0 0.0
    %1851 = vmatprep.subr.mxu0 0.0
    %1852 = vmatpush1.xpose.msra.mxu0 0.0
    %1853 = vmatprep.subr.mxu0 0.0
    %1854 = vmatpush1.xpose.msra.mxu0 0.0
    %1855 = vmatprep.subr.mxu0 0.0
    %1856 = vmatpush1.xpose.msra.mxu0 0.0
    %1857 = vmatprep.subr.mxu0 0.0
    %1858 = vmatpush1.xpose.msra.mxu0 0.0
    %1859 = vmatprep.subr.mxu0 0.0
    %1860 = vmatpush1.xpose.msra.mxu0 0.0
    %1861 = vmatprep.mubr.f32.mxu0 0.0
    %1862 = vmatmul.mubr.f32.gmra.mrb[0].mxu0 %v714
    %v1863 = vpop.f32.mrb[0].mxu0
    %v1864 = vadd.f32 %v1055, %v1863
    %v1865 = vpop.f32.mrb[0].mxu0
    %1866 = vmatprep.mubr.f32.mxu0 0.0
    %1867 = vmatmul.mubr.f32.gmra.mrb[0].mxu0 %v715
    %v1868 = vpop.f32.mrb[0].mxu0
    %v1869 = vadd.f32 %v1060, %v1868
    %v1870 = vpop.f32.mrb[0].mxu0
    %1871 = vdwg.mxu0
    %v1872 = vmul.f32 %v1864, 0.5
    %v1873 = vmul.f32 %v1869, 0.5
    %v1874 = vsel %vm1428, %v1872, -inf
    %1875 = vmax.xlane.f32.xlu0 %v1874
    %v1876 = vpop.xlane.xlu0 %1875
    %v1877 = vsel %vm1428, %v1873, -inf
    %1878 = vmax.xlane.f32.xlu0 %v1877
    %v1879 = vpop.xlane.xlu0 %1878
    %v1880 = vsub.f32 %v1872, %v1876
    %v1881 = vsub.f32 %v1873, %v1879
    %v1882 = vmul.f32 %v1880, 1.442695
    %v1883 = vpow.pop %v1882
    %v1884 = vmul.f32 %v1881, 1.442695
    %v1885 = vpow.pop %v1884
    %v1886 = vsel %vm1428, %v1883, 0.0
    %1887 = vadd.xlane.f32.xlu0 %v1886
    %v1888 = vpop.xlane.xlu0 %1887
    %v1889 = vsel %vm1428, %v1885, 0.0
    %1890 = vadd.xlane.f32.xlu0 %v1889
    %v1891 = vpop.xlane.xlu0 %1890
    %v1892 = vrcp.pop %v1888
    %v1893 = vmul.f32 %v1883, %v1892
    %v1894 = vrcp.pop %v1891
    %v1895 = vmul.f32 %v1885, %v1894
    %v1896 = vsel %vm1428, %v1789, -inf
    %1897 = vmax.xlane.f32.xlu0 %v1896
    %v1898 = vpop.xlane.xlu0 %1897
    %v1899 = vsel %vm1428, %v1794, -inf
    %1900 = vmax.xlane.f32.xlu0 %v1899
    %v1901 = vpop.xlane.xlu0 %1900
    %v1902 = vsub.f32 %v1789, %v1898
    %v1903 = vsub.f32 %v1794, %v1901
    %v1904 = vmul.f32 %v1902, 1.442695
    %v1905 = vpow.pop %v1904
    %v1906 = vmul.f32 %v1903, 1.442695
    %v1907 = vpow.pop %v1906
    %v1908 = vsel %vm1428, %v1905, 0.0
    %1909 = vadd.xlane.f32.xlu0 %v1908
    %v1910 = vpop.xlane.xlu0 %1909
    %v1911 = vsel %vm1428, %v1907, 0.0
    %1912 = vadd.xlane.f32.xlu0 %v1911
    %v1913 = vpop.xlane.xlu0 %1912
    %v1914 = vlog2.pop %v1910
    %v1915 = vmul.f32 %v1914, 0.6931472
    %v1916 = vlog2.pop %v1913
    %v1917 = vmul.f32 %v1916, 0.6931472
    %v1918 = vsub.f32 %v1902, %v1915
    %v1919 = vsub.f32 %v1903, %v1917
    %v1920 = vmax.f32 %v1896, %v1899
    %v1921 = vrot.slane %v1920, 4
    %v1922 = vmax.f32 %v1920, %v1921
    %v1923 = vrot.slane %v1922, 2
    %v1924 = vmax.f32 %v1922, %v1923
    %v1925 = vrot.slane %v1924, 1
    %v1926 = vmax.f32 %v1924, %v1925
    %v1927 = vsub.f32 %v1789, %v1926
    %v1928 = vsub.f32 %v1794, %v1926
    %v1929 = vmul.f32 %v1927, 1.442695
    %v1930 = vpow.pop %v1929
    %v1931 = vmul.f32 %v1928, 1.442695
    %v1932 = vpow.pop %v1931
    %v1933 = vsel %vm1428, %v1930, 0.0
    %v1934 = vsel %vm1428, %v1932, 0.0
    %v1935 = vadd.f32 %v1933, %v1934
    %v1936 = vrot.slane %v1935, 4
    %v1937 = vadd.f32 %v1935, %v1936
    %v1938 = vrot.slane %v1937, 2
    %v1939 = vadd.f32 %v1937, %v1938
    %v1940 = vrot.slane %v1939, 1
    %v1941 = vadd.f32 %v1939, %v1940
    %v1942 = vlog2.pop %v1941
    %v1943 = vmul.f32 %v1942, 0.6931472
    %v1944 = vsub.f32 %v1927, %v1943
    %v1945 = vsub.f32 %v1928, %v1943
    %v1946 = vsub.f32 0.0, %v1893
    %v1947 = vsub.f32 0.0, %v1895
    %v1948 = vmul.f32 %v1946, %v1918
    %v1949 = vmul.f32 %v1947, %v1919
    %v1950 = vsel %vm1428, %v1948, 0.0
    %1951 = vadd.xlane.f32.xlu0 %v1950
    %v1952 = vpop.xlane.xlu0 %1951
    %v1953 = vsel %vm1428, %v1949, 0.0
    %1954 = vadd.xlane.f32.xlu0 %v1953
    %v1955 = vpop.xlane.xlu0 %1954
    %v1956 = vadd.f32 %v1952, %v1955
    %v1957 = vrot.slane %v1956, 4
    %v1958 = vadd.f32 %v1956, %v1957
    %v1959 = vrot.slane %v1958, 2
    %v1960 = vadd.f32 %v1958, %v1959
    %v1961 = vrot.slane %v1960, 1
    %v1962 = vadd.f32 %v1960, %v1961
    %v1963 = vmul.f32 %v1946, %v1944
    %v1964 = vmul.f32 %v1947, %v1945
    %v1965 = vsel %vm1428, %v1963, 0.0
    %1966 = vadd.xlane.f32.xlu0 %v1965
    %v1967 = vpop.xlane.xlu0 %1966
    %v1968 = vsel %vm1428, %v1964, 0.0
    %1969 = vadd.xlane.f32.xlu0 %v1968
    %v1970 = vpop.xlane.xlu0 %1969
    %v1971 = vadd.f32 %v1967, %v1970
    %v1972 = vrot.slane %v1971, 4
    %v1973 = vadd.f32 %v1971, %v1972
    %v1974 = vrot.slane %v1973, 2
    %v1975 = vadd.f32 %v1973, %v1974
    %v1976 = vrot.slane %v1975, 1
    %v1977 = vadd.f32 %v1975, %v1976
    %v1978 = vadd.f32 %v1962, %v1977
    %v1979 = vmul.f32 %v1978, 0.03125
    %v1980 = vadd.f32 %v1979, %v1719
    %v1981 = vadd.f32 %v1980, %v1721
    %s1982 = vtos %v1981
    %s1983 = scalar_lea.smem [#allocation16], 0
    %1984 = sst [smem:[%s1983]] %s1982
    %s1985 = vtos %v1979
    %s1986 = scalar_lea.smem [#allocation16], 1
    %1987 = sst [smem:[%s1986]] %s1985
    %s1988 = vtos %v1719
    %s1989 = scalar_lea.smem [#allocation16], 2
    %1990 = sst [smem:[%s1989]] %s1988
    %s1991 = vtos %v1721
    %s1992 = scalar_lea.smem [#allocation16], 3
    %1993 = sst [smem:[%s1992]] %s1991
    // Predicated region
    $region98: #{st_gchb_core_forward.1} parent=1 // pred_check
      _
    $region99: #{st_gchb_core_forward.1} parent=1 // pred_check_branch
      %1995 = sbr.rel (0) target = $region101
    $region100: #{st_gchb_core_forward.1} parent=1 // pred_region
      %s1997 = ssub.s32 16, 16
      %1998 = vsyncadd [#allocation4], %s1997
      %s2000 = sshll.u32 %s16, 4
      %s2001 = int_to_ptr.vmem [resolvable:$true] %s2000
      %2003 = dma.smem_to_vmem [#allocation16], 16, %s2001, [#allocation4]
    $region101: #{st_gchb_core_forward.1} parent=1 // pred_fallthru
      _
    // Predicated region
    $region102: #{st_gchb_core_forward.1} parent=1 // pred_check
      _
    $region103: #{st_gchb_core_forward.1} parent=1 // pred_check_branch
      %2005 = sbr.rel (0) target = $region105
    $region104: #{st_gchb_core_forward.1} parent=1 // pred_region
      %2006 = dma.done [#allocation4], 16
    $region105: #{st_gchb_core_forward.1} parent=1 // pred_fallthru
      _
    %2007 = sfence
    %2008 = vsyncpa [#allocation3], 1
    %2009 = vsyncpa [#allocation6], 1
    %2010 = vsyncpa [#allocation9], 1
    %2011 = vsyncpa [#allocation12], 1
    %2012 = vsyncpa [#allocation15], 1
    %2013 = vsyncpa [#allocation4], 1

</llo_original>
